<compile_context>
chip_gen: v5e
topology: v5e:2x2
jax: 0.10.0
libtpu: 0.0.40
codegen_flags: <defaults>
</compile_context>

<pallas_src>
import jax
import jax.numpy as jnp
from jax.experimental import pallas as pl
from jax.experimental.pallas import tpu as pltpu

D_MODEL = 32
NHEAD = 4
HEAD_DIM = D_MODEL // NHEAD
DIM_FF = 64
NUM_LAYERS = 2
LN_EPS = 1e-5

VEC_ROWS = 8      # sublane-padded rows of the packed small-vector array
VEC_LANES = 128   # lane-dense width of the packed small-vector array


def _decoder_kernel(q_ref, k_ref, v_ref,        # activations: (1,S,D) blocks
                    wattn_ref,                  # (L, D, 4D)  = [wq | wk | wv | wo]
                    vec_ref,                    # (L, 8, 128) packed biases / LN params
                    w1_ref, w2_ref,             # (L, D, FF), (L, FF, D)
                    out_ref, attnw_ref):        # (1,S,D), (L,1,S,S)
    D, HD, H = D_MODEL, HEAD_DIM, NHEAD
    scale = 1.0 / (HD ** 0.5)

    # k, v are fixed across layers: loaded once per batch block, VMEM-resident.
    x = q_ref[0].astype(jnp.float32)    # running activations (S, D)
    k = k_ref[0].astype(jnp.float32)
    v = v_ref[0].astype(jnp.float32)
    S = x.shape[0]

    for l in range(NUM_LAYERS):                       # static unrolled layer loop
        Wl = wattn_ref[l]                             # (D, 4D) f32
        vec = vec_ref[l]                              # (8, 128) f32
        bq, bk, bv, bo = (vec[0, 0:D], vec[0, D:2 * D],
                          vec[0, 2 * D:3 * D], vec[0, 3 * D:4 * D])
        ln1w, ln1b, ln2w, ln2b = (vec[1, 0:D], vec[1, D:2 * D],
                                  vec[1, 2 * D:3 * D], vec[1, 3 * D:4 * D])
        b1 = vec[2, 0:DIM_FF]
        b2 = vec[2, DIM_FF:DIM_FF + D]

        # --- multi-head attention (MXU) ---
        Q = jnp.dot(x, Wl[:, 0:D], preferred_element_type=jnp.float32) + bq
        K = jnp.dot(k, Wl[:, D:2 * D], preferred_element_type=jnp.float32) + bk
        V = jnp.dot(v, Wl[:, 2 * D:3 * D], preferred_element_type=jnp.float32) + bv
        Wo = Wl[:, 3 * D:4 * D]                       # (D, D)

        attn = jnp.zeros_like(x)                      # (S, D) accumulator
        w_sum = jnp.zeros((S, S), jnp.float32)
        for h in range(H):                            # static head loop
            sl = slice(h * HD, (h + 1) * HD)
            s = jnp.dot(Q[:, sl], K[:, sl].T,
                        preferred_element_type=jnp.float32) * scale
            s = s - jnp.max(s, axis=-1, keepdims=True)
            e = jnp.exp(s)
            p = e * pl.reciprocal(jnp.sum(e, axis=-1, keepdims=True), approx=True)
            w_sum = w_sum + p
            # accumulate the output projection per head — no lane concatenate
            ph_v = jnp.dot(p, V[:, sl], preferred_element_type=jnp.float32)
            attn = attn + jnp.dot(ph_v, Wo[sl, :], preferred_element_type=jnp.float32)
        attn = attn + bo

        # average_attn_weights=True semantics of nn.MultiheadAttention
        attnw_ref[l, 0] = (w_sum * (1.0 / H)).astype(attnw_ref.dtype)

        # --- residual 1 ('sum') + LayerNorm1 (post-norm) ---
        y = x + attn
        mu = jnp.mean(y, axis=-1, keepdims=True)
        var = jnp.mean((y - mu) ** 2, axis=-1, keepdims=True)
        y = (y - mu) * jax.lax.rsqrt(var + LN_EPS) * ln1w + ln1b

        # --- feed-forward (relu); eval-mode dropout == identity ---
        h1 = jnp.maximum(
            jnp.dot(y, w1_ref[l], preferred_element_type=jnp.float32) + b1, 0.0)
        ff = jnp.dot(h1, w2_ref[l], preferred_element_type=jnp.float32) + b2

        # --- residual 2 ('sum') + LayerNorm2 ---
        z = y + ff
        mu2 = jnp.mean(z, axis=-1, keepdims=True)
        var2 = jnp.mean((z - mu2) ** 2, axis=-1, keepdims=True)
        x = (z - mu2) * jax.lax.rsqrt(var2 + LN_EPS) * ln2w + ln2b

    out_ref[0] = x.astype(out_ref.dtype)


def _pack_layer_params(params):
    """Pack one layer's 16 small arrays into 4 lane-dense arrays."""
    (wq, wk, wv, bq, bk, bv, wo, bo,
     ln1w, ln1b, ln2w, ln2b, w1, b1, w2, b2) = params
    w_attn = jnp.concatenate([wq, wk, wv, wo], axis=1)          # (D, 4D) == (32, 128)
    vec = jnp.zeros((VEC_ROWS, VEC_LANES), jnp.float32)
    vec = vec.at[0, 0:4 * D_MODEL].set(jnp.concatenate([bq, bk, bv, bo]))
    vec = vec.at[1, 0:4 * D_MODEL].set(jnp.concatenate([ln1w, ln1b, ln2w, ln2b]))
    vec = vec.at[2, 0:DIM_FF + D_MODEL].set(jnp.concatenate([b1, b2]))
    return w_attn, vec, w1, w2


def transformer_decoder(q, k, v, layer_params_list):
    """Matches TransformerDecoder.forward: q updated per layer, k/v fixed, norm=None.
    Single fused pallas_call over all layers."""
    B, S, D = q.shape
    L = len(layer_params_list)

    packed = [_pack_layer_params(p) for p in layer_params_list]
    w_attn = jnp.stack([p[0] for p in packed])     # (L, D, 4D)
    vecs = jnp.stack([p[1] for p in packed])       # (L, 8, 128)
    w1 = jnp.stack([p[2] for p in packed])         # (L, D, FF)
    w2 = jnp.stack([p[3] for p in packed])         # (L, FF, D)

    def fixed(shape):
        return pl.BlockSpec(shape, lambda b, _s=len(shape): (0,) * _s)

    bsd = pl.BlockSpec((1, S, D), lambda b: (b, 0, 0))
    grid_spec = pltpu.PrefetchScalarGridSpec(
        num_scalar_prefetch=0,
        grid=(B,),                                  # one batch element per TC step
        in_specs=[bsd, bsd, bsd,
                  fixed((L, D, 4 * D)),
                  fixed((L, VEC_ROWS, VEC_LANES)),
                  fixed((L, D, DIM_FF)),
                  fixed((L, DIM_FF, D))],
        out_specs=(pl.BlockSpec((1, S, D), lambda b: (b, 0, 0)),
                   pl.BlockSpec((L, 1, S, S), lambda b: (0, b, 0, 0))),
    )
    out_shape = (jax.ShapeDtypeStruct((B, S, D), q.dtype),
                 jax.ShapeDtypeStruct((L, B, S, S), jnp.float32))

    out, attnw = pl.pallas_call(
        _decoder_kernel,
        grid_spec=grid_spec,
        out_shape=out_shape,
        compiler_params=pltpu.CompilerParams(dimension_semantics=("parallel",)),
    )(q, k, v, w_attn, vecs, w1, w2)

    return out, [attnw[l] for l in range(L)]


# ---------------- deterministic parameter init ----------------
def init_layer_params(key):
    ks = jax.random.split(key, 16)

    def dense_t(kk, din, dout, scale=0.05):
        return jax.random.normal(kk, (din, dout), jnp.float32) * scale   # (in, out)

    def vec(kk, n, scale=0.02):
        return jax.random.normal(kk, (n,), jnp.float32) * scale

    wq = dense_t(ks[0], D_MODEL, D_MODEL); bq = vec(ks[1], D_MODEL)
    wk = dense_t(ks[2], D_MODEL, D_MODEL); bk = vec(ks[3], D_MODEL)
    wv = dense_t(ks[4], D_MODEL, D_MODEL); bv = vec(ks[5], D_MODEL)
    wo = dense_t(ks[6], D_MODEL, D_MODEL); bo = vec(ks[7], D_MODEL)
    ln1w = 1.0 + vec(ks[8], D_MODEL); ln1b = vec(ks[9], D_MODEL)
    ln2w = 1.0 + vec(ks[10], D_MODEL); ln2b = vec(ks[11], D_MODEL)
    w1 = dense_t(ks[12], D_MODEL, DIM_FF); b1 = vec(ks[13], DIM_FF)
    w2 = dense_t(ks[14], DIM_FF, D_MODEL); b2 = vec(ks[15], D_MODEL)
    return (wq, wk, wv, bq, bk, bv, wo, bo,
            ln1w, ln1b, ln2w, ln2b, w1, b1, w2, b2)


# ---------------- pure-JAX reference (correctness check) ----------------
def _ref_layer(q, k, v, params):
    (wq, wk, wv, bq, bk, bv, wo, bo,
     ln1w, ln1b, ln2w, ln2b, w1, b1, w2, b2) = params
    B, S, D = q.shape
    Q = q @ wq + bq
    K = k @ wk + bk
    V = v @ wv + bv

    def heads(x):
        return x.reshape(B, S, NHEAD, HEAD_DIM).transpose(0, 2, 1, 3)

    Qh, Kh, Vh = heads(Q), heads(K), heads(V)
    s = jnp.einsum('bhqd,bhkd->bhqk', Qh, Kh) / (HEAD_DIM ** 0.5)
    p = jax.nn.softmax(s, axis=-1)
    w = p.mean(axis=1)
    o = jnp.einsum('bhqk,bhkd->bhqd', p, Vh).transpose(0, 2, 1, 3).reshape(B, S, D)
    o = o @ wo + bo

    def ln(x, g, b):
        mu = x.mean(-1, keepdims=True)
        var = ((x - mu) ** 2).mean(-1, keepdims=True)
        return (x - mu) * jax.lax.rsqrt(var + LN_EPS) * g + b

    x = ln(q + o, ln1w, ln1b)
    ff = jax.nn.relu(x @ w1 + b1) @ w2 + b2
    y = ln(x + ff, ln2w, ln2b)
    return y, w


def _ref_decoder(q, k, v, layer_params_list):
    weights = []
    output = q
    for params in layer_params_list:
        output, w = _ref_layer(q, k, v, params)
        q = output
        weights.append(w)
    return output, weights


if __name__ == "__main__":
    B, S = 2, 8
    key = jax.random.PRNGKey(0)
    kq, kk, kv, kp = jax.random.split(key, 4)
    q = jax.random.normal(kq, (B, S, D_MODEL), jnp.float32)
    k = jax.random.normal(kk, (B, S, D_MODEL), jnp.float32)
    v = jax.random.normal(kv, (B, S, D_MODEL), jnp.float32)

    layer_params = [init_layer_params(lk) for lk in jax.random.split(kp, NUM_LAYERS)]

    out, weights = transformer_decoder(q, k, v, layer_params)
    out = jax.block_until_ready(out)
    weights = [jax.block_until_ready(w) for w in weights]

    ref_out, ref_weights = _ref_decoder(q, k, v, layer_params)
    assert out.shape == (B, S, D_MODEL)
    assert all(w.shape == (B, S, S) for w in weights)
    # pl.reciprocal(approx=True) in the softmax perturbs results at ~1e-4 level.
    assert jnp.allclose(out, ref_out, atol=2e-3, rtol=2e-3), \
        float(jnp.max(jnp.abs(out - ref_out)))
    for w, rw in zip(weights, ref_weights):
        assert jnp.allclose(w, rw, atol=2e-3, rtol=2e-3)

    print("KERNEL_OK")
</pallas_src>

<mosaic_0001>
module attributes {stable_mosaic.version = 11 : i64} {
  func.func @_decoder_kernel(%arg0: i32, %arg1: memref<1x8x32xf32, #tpu.memory_space<vmem>>, %arg2: memref<1x8x32xf32, #tpu.memory_space<vmem>>, %arg3: memref<1x8x32xf32, #tpu.memory_space<vmem>>, %arg4: memref<2x32x128xf32, #tpu.memory_space<vmem>>, %arg5: memref<2x8x128xf32, #tpu.memory_space<vmem>>, %arg6: memref<2x32x64xf32, #tpu.memory_space<vmem>>, %arg7: memref<2x64x32xf32, #tpu.memory_space<vmem>>, %arg8: memref<1x8x32xf32, #tpu.memory_space<vmem>>, %arg9: memref<2x1x8x8xf32, #tpu.memory_space<vmem>>) attributes {dimension_semantics = [#tpu.dimension_semantics<parallel>], iteration_bounds = array<i64: 2>, scalar_prefetch = 0 : i64, scratch_operands = 0 : i64, tpu.core_type = #tpu.core_type<tc>, window_params = [{transform_indices = @transform_0, window_bounds = array<i64: 1, 8, 32>}, {transform_indices = @transform_1, window_bounds = array<i64: 1, 8, 32>}, {transform_indices = @transform_2, window_bounds = array<i64: 1, 8, 32>}, {pipeline_mode = #tpu.pipeline_mode<synchronous>, transform_indices = @transform_3, window_bounds = array<i64: 2, 32, 128>}, {pipeline_mode = #tpu.pipeline_mode<synchronous>, transform_indices = @transform_4, window_bounds = array<i64: 2, 8, 128>}, {pipeline_mode = #tpu.pipeline_mode<synchronous>, transform_indices = @transform_5, window_bounds = array<i64: 2, 32, 64>}, {pipeline_mode = #tpu.pipeline_mode<synchronous>, transform_indices = @transform_6, window_bounds = array<i64: 2, 64, 32>}, {transform_indices = @transform_7, window_bounds = array<i64: 1, 8, 32>}, {transform_indices = @transform_8, window_bounds = array<i64: 2, 1, 8, 8>}]} {
    %c0 = arith.constant 0 : index
    %c0_0 = arith.constant 0 : index
    %c0_1 = arith.constant 0 : index
    %0 = vector.load %arg1[%c0, %c0_0, %c0_1] : memref<1x8x32xf32, #tpu.memory_space<vmem>>, vector<1x8x32xf32>
    %1 = vector.shape_cast %0 : vector<1x8x32xf32> to vector<8x32xf32>
    %c0_2 = arith.constant 0 : index
    %c0_3 = arith.constant 0 : index
    %c0_4 = arith.constant 0 : index
    %2 = vector.load %arg2[%c0_2, %c0_3, %c0_4] : memref<1x8x32xf32, #tpu.memory_space<vmem>>, vector<1x8x32xf32>
    %3 = vector.shape_cast %2 : vector<1x8x32xf32> to vector<8x32xf32>
    %c0_5 = arith.constant 0 : index
    %c0_6 = arith.constant 0 : index
    %c0_7 = arith.constant 0 : index
    %4 = vector.load %arg3[%c0_5, %c0_6, %c0_7] : memref<1x8x32xf32, #tpu.memory_space<vmem>>, vector<1x8x32xf32>
    %5 = vector.shape_cast %4 : vector<1x8x32xf32> to vector<8x32xf32>
    %c0_8 = arith.constant 0 : index
    %c0_9 = arith.constant 0 : index
    %c0_10 = arith.constant 0 : index
    %6 = vector.load %arg4[%c0_8, %c0_9, %c0_10] : memref<2x32x128xf32, #tpu.memory_space<vmem>>, vector<1x32x128xf32>
    %7 = vector.shape_cast %6 : vector<1x32x128xf32> to vector<32x128xf32>
    %c0_11 = arith.constant 0 : index
    %c0_12 = arith.constant 0 : index
    %c0_13 = arith.constant 0 : index
    %8 = vector.load %arg5[%c0_11, %c0_12, %c0_13] : memref<2x8x128xf32, #tpu.memory_space<vmem>>, vector<1x8x128xf32>
    %9 = vector.shape_cast %8 : vector<1x8x128xf32> to vector<8x128xf32>
    %10 = vector.extract_strided_slice %9 {offsets = [0, 0], sizes = [1, 32], strides = [1, 1]} : vector<8x128xf32> to vector<1x32xf32>
    %11 = vector.shape_cast %10 : vector<1x32xf32> to vector<32xf32>
    %12 = vector.extract_strided_slice %9 {offsets = [0, 32], sizes = [1, 32], strides = [1, 1]} : vector<8x128xf32> to vector<1x32xf32>
    %13 = vector.shape_cast %12 : vector<1x32xf32> to vector<32xf32>
    %14 = vector.extract_strided_slice %9 {offsets = [0, 64], sizes = [1, 32], strides = [1, 1]} : vector<8x128xf32> to vector<1x32xf32>
    %15 = vector.shape_cast %14 : vector<1x32xf32> to vector<32xf32>
    %16 = vector.extract_strided_slice %9 {offsets = [0, 96], sizes = [1, 32], strides = [1, 1]} : vector<8x128xf32> to vector<1x32xf32>
    %17 = vector.shape_cast %16 : vector<1x32xf32> to vector<32xf32>
    %18 = vector.extract_strided_slice %9 {offsets = [1, 0], sizes = [1, 32], strides = [1, 1]} : vector<8x128xf32> to vector<1x32xf32>
    %19 = vector.shape_cast %18 : vector<1x32xf32> to vector<32xf32>
    %20 = vector.extract_strided_slice %9 {offsets = [1, 32], sizes = [1, 32], strides = [1, 1]} : vector<8x128xf32> to vector<1x32xf32>
    %21 = vector.shape_cast %20 : vector<1x32xf32> to vector<32xf32>
    %22 = vector.extract_strided_slice %9 {offsets = [1, 64], sizes = [1, 32], strides = [1, 1]} : vector<8x128xf32> to vector<1x32xf32>
    %23 = vector.shape_cast %22 : vector<1x32xf32> to vector<32xf32>
    %24 = vector.extract_strided_slice %9 {offsets = [1, 96], sizes = [1, 32], strides = [1, 1]} : vector<8x128xf32> to vector<1x32xf32>
    %25 = vector.shape_cast %24 : vector<1x32xf32> to vector<32xf32>
    %26 = vector.extract_strided_slice %9 {offsets = [2, 0], sizes = [1, 64], strides = [1, 1]} : vector<8x128xf32> to vector<1x64xf32>
    %27 = vector.shape_cast %26 : vector<1x64xf32> to vector<64xf32>
    %28 = vector.extract_strided_slice %9 {offsets = [2, 64], sizes = [1, 32], strides = [1, 1]} : vector<8x128xf32> to vector<1x32xf32>
    %29 = vector.shape_cast %28 : vector<1x32xf32> to vector<32xf32>
    %30 = vector.extract_strided_slice %7 {offsets = [0, 0], sizes = [32, 32], strides = [1, 1]} : vector<32x128xf32> to vector<32x32xf32>
    %cst = arith.constant dense<0.000000e+00> : vector<8x32xf32>
    %31 = tpu.matmul %1, %30, %cst {dimension_numbers = #tpu.dot_dimension_numbers<[1], [0], [0], [1], [0, 0, 1, 1], [], []>} : vector<8x32xf32>, vector<32x32xf32>, vector<8x32xf32> -> vector<8x32xf32>
    %32 = vector.shape_cast %11 : vector<32xf32> to vector<1x32xf32>
    %33 = vector.broadcast %32 : vector<1x32xf32> to vector<8x32xf32>
    %34 = arith.addf %31, %33 : vector<8x32xf32>
    %35 = vector.extract_strided_slice %7 {offsets = [0, 32], sizes = [32, 32], strides = [1, 1]} : vector<32x128xf32> to vector<32x32xf32>
    %cst_14 = arith.constant dense<0.000000e+00> : vector<8x32xf32>
    %36 = tpu.matmul %3, %35, %cst_14 {dimension_numbers = #tpu.dot_dimension_numbers<[1], [0], [0], [1], [0, 0, 1, 1], [], []>} : vector<8x32xf32>, vector<32x32xf32>, vector<8x32xf32> -> vector<8x32xf32>
    %37 = vector.shape_cast %13 : vector<32xf32> to vector<1x32xf32>
    %38 = vector.broadcast %37 : vector<1x32xf32> to vector<8x32xf32>
    %39 = arith.addf %36, %38 : vector<8x32xf32>
    %40 = vector.extract_strided_slice %7 {offsets = [0, 64], sizes = [32, 32], strides = [1, 1]} : vector<32x128xf32> to vector<32x32xf32>
    %cst_15 = arith.constant dense<0.000000e+00> : vector<8x32xf32>
    %41 = tpu.matmul %5, %40, %cst_15 {dimension_numbers = #tpu.dot_dimension_numbers<[1], [0], [0], [1], [0, 0, 1, 1], [], []>} : vector<8x32xf32>, vector<32x32xf32>, vector<8x32xf32> -> vector<8x32xf32>
    %42 = vector.shape_cast %15 : vector<32xf32> to vector<1x32xf32>
    %43 = vector.broadcast %42 : vector<1x32xf32> to vector<8x32xf32>
    %44 = arith.addf %41, %43 : vector<8x32xf32>
    %45 = vector.extract_strided_slice %7 {offsets = [0, 96], sizes = [32, 32], strides = [1, 1]} : vector<32x128xf32> to vector<32x32xf32>
    %cst_16 = arith.constant 0.000000e+00 : f32
    %46 = vector.broadcast %cst_16 : f32 to vector<8x32xf32>
    %cst_17 = arith.constant 0.000000e+00 : f32
    %47 = vector.broadcast %cst_17 : f32 to vector<8x8xf32>
    %48 = vector.extract_strided_slice %34 {offsets = [0, 0], sizes = [8, 8], strides = [1, 1]} : vector<8x32xf32> to vector<8x8xf32>
    %49 = vector.extract_strided_slice %39 {offsets = [0, 0], sizes = [8, 8], strides = [1, 1]} : vector<8x32xf32> to vector<8x8xf32>
    %50 = tpu.transpose %49, [1, 0] : vector<8x8xf32> -> vector<8x8xf32>
    %cst_18 = arith.constant dense<0.000000e+00> : vector<8x8xf32>
    %51 = tpu.matmul %48, %50, %cst_18 {dimension_numbers = #tpu.dot_dimension_numbers<[1], [0], [0], [1], [0, 0, 1, 1], [], []>} : vector<8x8xf32>, vector<8x8xf32>, vector<8x8xf32> -> vector<8x8xf32>
    %cst_19 = arith.constant 0.353553385 : f32
    %52 = vector.broadcast %cst_19 : f32 to vector<8x8xf32>
    %53 = arith.mulf %51, %52 : vector<8x8xf32>
    %cst_20 = arith.constant dense<0xFF800000> : vector<8xf32>
    %54 = vector.multi_reduction <maximumf>, %53, %cst_20 [1] : vector<8x8xf32> to vector<8xf32>
    %55 = vector.shape_cast %54 : vector<8xf32> to vector<8x1xf32>
    %56 = vector.broadcast %55 : vector<8x1xf32> to vector<8x8xf32>
    %57 = arith.subf %53, %56 : vector<8x8xf32>
    %58 = math.exp %57 : vector<8x8xf32>
    %cst_21 = arith.constant dense<0.000000e+00> : vector<8xf32>
    %59 = vector.multi_reduction <add>, %58, %cst_21 [1] : vector<8x8xf32> to vector<8xf32>
    %60 = vector.shape_cast %59 : vector<8xf32> to vector<8x1xf32>
    %61 = tpu.reciprocal %60 {approx = true} : vector<8x1xf32> -> vector<8x1xf32>
    %62 = vector.broadcast %61 : vector<8x1xf32> to vector<8x8xf32>
    %63 = arith.mulf %58, %62 : vector<8x8xf32>
    %64 = arith.addf %47, %63 : vector<8x8xf32>
    %65 = vector.extract_strided_slice %44 {offsets = [0, 0], sizes = [8, 8], strides = [1, 1]} : vector<8x32xf32> to vector<8x8xf32>
    %cst_22 = arith.constant dense<0.000000e+00> : vector<8x8xf32>
    %66 = tpu.matmul %63, %65, %cst_22 {dimension_numbers = #tpu.dot_dimension_numbers<[1], [0], [0], [1], [0, 0, 1, 1], [], []>} : vector<8x8xf32>, vector<8x8xf32>, vector<8x8xf32> -> vector<8x8xf32>
    %67 = vector.extract_strided_slice %45 {offsets = [0, 0], sizes = [8, 32], strides = [1, 1]} : vector<32x32xf32> to vector<8x32xf32>
    %cst_23 = arith.constant dense<0.000000e+00> : vector<8x32xf32>
    %68 = tpu.matmul %66, %67, %cst_23 {dimension_numbers = #tpu.dot_dimension_numbers<[1], [0], [0], [1], [0, 0, 1, 1], [], []>} : vector<8x8xf32>, vector<8x32xf32>, vector<8x32xf32> -> vector<8x32xf32>
    %69 = arith.addf %46, %68 : vector<8x32xf32>
    %70 = vector.extract_strided_slice %34 {offsets = [0, 8], sizes = [8, 8], strides = [1, 1]} : vector<8x32xf32> to vector<8x8xf32>
    %71 = vector.extract_strided_slice %39 {offsets = [0, 8], sizes = [8, 8], strides = [1, 1]} : vector<8x32xf32> to vector<8x8xf32>
    %72 = tpu.transpose %71, [1, 0] : vector<8x8xf32> -> vector<8x8xf32>
    %cst_24 = arith.constant dense<0.000000e+00> : vector<8x8xf32>
    %73 = tpu.matmul %70, %72, %cst_24 {dimension_numbers = #tpu.dot_dimension_numbers<[1], [0], [0], [1], [0, 0, 1, 1], [], []>} : vector<8x8xf32>, vector<8x8xf32>, vector<8x8xf32> -> vector<8x8xf32>
    %cst_25 = arith.constant 0.353553385 : f32
    %74 = vector.broadcast %cst_25 : f32 to vector<8x8xf32>
    %75 = arith.mulf %73, %74 : vector<8x8xf32>
    %cst_26 = arith.constant dense<0xFF800000> : vector<8xf32>
    %76 = vector.multi_reduction <maximumf>, %75, %cst_26 [1] : vector<8x8xf32> to vector<8xf32>
    %77 = vector.shape_cast %76 : vector<8xf32> to vector<8x1xf32>
    %78 = vector.broadcast %77 : vector<8x1xf32> to vector<8x8xf32>
    %79 = arith.subf %75, %78 : vector<8x8xf32>
    %80 = math.exp %79 : vector<8x8xf32>
    %cst_27 = arith.constant dense<0.000000e+00> : vector<8xf32>
    %81 = vector.multi_reduction <add>, %80, %cst_27 [1] : vector<8x8xf32> to vector<8xf32>
    %82 = vector.shape_cast %81 : vector<8xf32> to vector<8x1xf32>
    %83 = tpu.reciprocal %82 {approx = true} : vector<8x1xf32> -> vector<8x1xf32>
    %84 = vector.broadcast %83 : vector<8x1xf32> to vector<8x8xf32>
    %85 = arith.mulf %80, %84 : vector<8x8xf32>
    %86 = arith.addf %64, %85 : vector<8x8xf32>
    %87 = vector.extract_strided_slice %44 {offsets = [0, 8], sizes = [8, 8], strides = [1, 1]} : vector<8x32xf32> to vector<8x8xf32>
    %cst_28 = arith.constant dense<0.000000e+00> : vector<8x8xf32>
    %88 = tpu.matmul %85, %87, %cst_28 {dimension_numbers = #tpu.dot_dimension_numbers<[1], [0], [0], [1], [0, 0, 1, 1], [], []>} : vector<8x8xf32>, vector<8x8xf32>, vector<8x8xf32> -> vector<8x8xf32>
    %89 = vector.extract_strided_slice %45 {offsets = [8, 0], sizes = [8, 32], strides = [1, 1]} : vector<32x32xf32> to vector<8x32xf32>
    %cst_29 = arith.constant dense<0.000000e+00> : vector<8x32xf32>
    %90 = tpu.matmul %88, %89, %cst_29 {dimension_numbers = #tpu.dot_dimension_numbers<[1], [0], [0], [1], [0, 0, 1, 1], [], []>} : vector<8x8xf32>, vector<8x32xf32>, vector<8x32xf32> -> vector<8x32xf32>
    %91 = arith.addf %69, %90 : vector<8x32xf32>
    %92 = vector.extract_strided_slice %34 {offsets = [0, 16], sizes = [8, 8], strides = [1, 1]} : vector<8x32xf32> to vector<8x8xf32>
    %93 = vector.extract_strided_slice %39 {offsets = [0, 16], sizes = [8, 8], strides = [1, 1]} : vector<8x32xf32> to vector<8x8xf32>
    %94 = tpu.transpose %93, [1, 0] : vector<8x8xf32> -> vector<8x8xf32>
    %cst_30 = arith.constant dense<0.000000e+00> : vector<8x8xf32>
    %95 = tpu.matmul %92, %94, %cst_30 {dimension_numbers = #tpu.dot_dimension_numbers<[1], [0], [0], [1], [0, 0, 1, 1], [], []>} : vector<8x8xf32>, vector<8x8xf32>, vector<8x8xf32> -> vector<8x8xf32>
    %cst_31 = arith.constant 0.353553385 : f32
    %96 = vector.broadcast %cst_31 : f32 to vector<8x8xf32>
    %97 = arith.mulf %95, %96 : vector<8x8xf32>
    %cst_32 = arith.constant dense<0xFF800000> : vector<8xf32>
    %98 = vector.multi_reduction <maximumf>, %97, %cst_32 [1] : vector<8x8xf32> to vector<8xf32>
    %99 = vector.shape_cast %98 : vector<8xf32> to vector<8x1xf32>
    %100 = vector.broadcast %99 : vector<8x1xf32> to vector<8x8xf32>
    %101 = arith.subf %97, %100 : vector<8x8xf32>
    %102 = math.exp %101 : vector<8x8xf32>
    %cst_33 = arith.constant dense<0.000000e+00> : vector<8xf32>
    %103 = vector.multi_reduction <add>, %102, %cst_33 [1] : vector<8x8xf32> to vector<8xf32>
    %104 = vector.shape_cast %103 : vector<8xf32> to vector<8x1xf32>
    %105 = tpu.reciprocal %104 {approx = true} : vector<8x1xf32> -> vector<8x1xf32>
    %106 = vector.broadcast %105 : vector<8x1xf32> to vector<8x8xf32>
    %107 = arith.mulf %102, %106 : vector<8x8xf32>
    %108 = arith.addf %86, %107 : vector<8x8xf32>
    %109 = vector.extract_strided_slice %44 {offsets = [0, 16], sizes = [8, 8], strides = [1, 1]} : vector<8x32xf32> to vector<8x8xf32>
    %cst_34 = arith.constant dense<0.000000e+00> : vector<8x8xf32>
    %110 = tpu.matmul %107, %109, %cst_34 {dimension_numbers = #tpu.dot_dimension_numbers<[1], [0], [0], [1], [0, 0, 1, 1], [], []>} : vector<8x8xf32>, vector<8x8xf32>, vector<8x8xf32> -> vector<8x8xf32>
    %111 = vector.extract_strided_slice %45 {offsets = [16, 0], sizes = [8, 32], strides = [1, 1]} : vector<32x32xf32> to vector<8x32xf32>
    %cst_35 = arith.constant dense<0.000000e+00> : vector<8x32xf32>
    %112 = tpu.matmul %110, %111, %cst_35 {dimension_numbers = #tpu.dot_dimension_numbers<[1], [0], [0], [1], [0, 0, 1, 1], [], []>} : vector<8x8xf32>, vector<8x32xf32>, vector<8x32xf32> -> vector<8x32xf32>
    %113 = arith.addf %91, %112 : vector<8x32xf32>
    %114 = vector.extract_strided_slice %34 {offsets = [0, 24], sizes = [8, 8], strides = [1, 1]} : vector<8x32xf32> to vector<8x8xf32>
    %115 = vector.extract_strided_slice %39 {offsets = [0, 24], sizes = [8, 8], strides = [1, 1]} : vector<8x32xf32> to vector<8x8xf32>
    %116 = tpu.transpose %115, [1, 0] : vector<8x8xf32> -> vector<8x8xf32>
    %cst_36 = arith.constant dense<0.000000e+00> : vector<8x8xf32>
    %117 = tpu.matmul %114, %116, %cst_36 {dimension_numbers = #tpu.dot_dimension_numbers<[1], [0], [0], [1], [0, 0, 1, 1], [], []>} : vector<8x8xf32>, vector<8x8xf32>, vector<8x8xf32> -> vector<8x8xf32>
    %cst_37 = arith.constant 0.353553385 : f32
    %118 = vector.broadcast %cst_37 : f32 to vector<8x8xf32>
    %119 = arith.mulf %117, %118 : vector<8x8xf32>
    %cst_38 = arith.constant dense<0xFF800000> : vector<8xf32>
    %120 = vector.multi_reduction <maximumf>, %119, %cst_38 [1] : vector<8x8xf32> to vector<8xf32>
    %121 = vector.shape_cast %120 : vector<8xf32> to vector<8x1xf32>
    %122 = vector.broadcast %121 : vector<8x1xf32> to vector<8x8xf32>
    %123 = arith.subf %119, %122 : vector<8x8xf32>
    %124 = math.exp %123 : vector<8x8xf32>
    %cst_39 = arith.constant dense<0.000000e+00> : vector<8xf32>
    %125 = vector.multi_reduction <add>, %124, %cst_39 [1] : vector<8x8xf32> to vector<8xf32>
    %126 = vector.shape_cast %125 : vector<8xf32> to vector<8x1xf32>
    %127 = tpu.reciprocal %126 {approx = true} : vector<8x1xf32> -> vector<8x1xf32>
    %128 = vector.broadcast %127 : vector<8x1xf32> to vector<8x8xf32>
    %129 = arith.mulf %124, %128 : vector<8x8xf32>
    %130 = arith.addf %108, %129 : vector<8x8xf32>
    %131 = vector.extract_strided_slice %44 {offsets = [0, 24], sizes = [8, 8], strides = [1, 1]} : vector<8x32xf32> to vector<8x8xf32>
    %cst_40 = arith.constant dense<0.000000e+00> : vector<8x8xf32>
    %132 = tpu.matmul %129, %131, %cst_40 {dimension_numbers = #tpu.dot_dimension_numbers<[1], [0], [0], [1], [0, 0, 1, 1], [], []>} : vector<8x8xf32>, vector<8x8xf32>, vector<8x8xf32> -> vector<8x8xf32>
    %133 = vector.extract_strided_slice %45 {offsets = [24, 0], sizes = [8, 32], strides = [1, 1]} : vector<32x32xf32> to vector<8x32xf32>
    %cst_41 = arith.constant dense<0.000000e+00> : vector<8x32xf32>
    %134 = tpu.matmul %132, %133, %cst_41 {dimension_numbers = #tpu.dot_dimension_numbers<[1], [0], [0], [1], [0, 0, 1, 1], [], []>} : vector<8x8xf32>, vector<8x32xf32>, vector<8x32xf32> -> vector<8x32xf32>
    %135 = arith.addf %113, %134 : vector<8x32xf32>
    %136 = vector.shape_cast %17 : vector<32xf32> to vector<1x32xf32>
    %137 = vector.broadcast %136 : vector<1x32xf32> to vector<8x32xf32>
    %138 = arith.addf %135, %137 : vector<8x32xf32>
    %cst_42 = arith.constant 2.500000e-01 : f32
    %139 = vector.broadcast %cst_42 : f32 to vector<8x8xf32>
    %140 = arith.mulf %130, %139 : vector<8x8xf32>
    %c0_43 = arith.constant 0 : index
    %c0_44 = arith.constant 0 : index
    %c0_45 = arith.constant 0 : index
    %c0_46 = arith.constant 0 : index
    %141 = vector.load %arg9[%c0_43, %c0_44, %c0_45, %c0_46] : memref<2x1x8x8xf32, #tpu.memory_space<vmem>>, vector<1x1x8x8xf32>
    %142 = vector.shape_cast %141 : vector<1x1x8x8xf32> to vector<8x8xf32>
    %143 = vector.shape_cast %140 : vector<8x8xf32> to vector<1x1x8x8xf32>
    tpu.vector_store %arg9[%c0_43, %c0_44, %c0_45, %c0_46], %143 {strides = array<i32>} : memref<2x1x8x8xf32, #tpu.memory_space<vmem>>, vector<1x1x8x8xf32>,
    %144 = arith.addf %1, %138 : vector<8x32xf32>
    %cst_47 = arith.constant dense<0.000000e+00> : vector<8xf32>
    %145 = vector.multi_reduction <add>, %144, %cst_47 [1] : vector<8x32xf32> to vector<8xf32>
    %146 = vector.shape_cast %145 : vector<8xf32> to vector<8x1xf32>
    %cst_48 = arith.constant 3.200000e+01 : f32
    %147 = vector.broadcast %cst_48 : f32 to vector<8x1xf32>
    %148 = arith.divf %146, %147 : vector<8x1xf32>
    %149 = vector.broadcast %148 : vector<8x1xf32> to vector<8x32xf32>
    %150 = arith.subf %144, %149 : vector<8x32xf32>
    %151 = arith.mulf %150, %150 : vector<8x32xf32>
    %cst_49 = arith.constant dense<0.000000e+00> : vector<8xf32>
    %152 = vector.multi_reduction <add>, %151, %cst_49 [1] : vector<8x32xf32> to vector<8xf32>
    %153 = vector.shape_cast %152 : vector<8xf32> to vector<8x1xf32>
    %cst_50 = arith.constant 3.200000e+01 : f32
    %154 = vector.broadcast %cst_50 : f32 to vector<8x1xf32>
    %155 = arith.divf %153, %154 : vector<8x1xf32>
    %156 = vector.broadcast %148 : vector<8x1xf32> to vector<8x32xf32>
    %157 = arith.subf %144, %156 : vector<8x32xf32>
    %cst_51 = arith.constant 9.99999974E-6 : f32
    %158 = vector.broadcast %cst_51 : f32 to vector<8x1xf32>
    %159 = arith.addf %155, %158 : vector<8x1xf32>
    %160 = math.rsqrt %159 : vector<8x1xf32>
    %161 = vector.broadcast %160 : vector<8x1xf32> to vector<8x32xf32>
    %162 = arith.mulf %157, %161 : vector<8x32xf32>
    %163 = vector.shape_cast %19 : vector<32xf32> to vector<1x32xf32>
    %164 = vector.broadcast %163 : vector<1x32xf32> to vector<8x32xf32>
    %165 = arith.mulf %162, %164 : vector<8x32xf32>
    %166 = vector.shape_cast %21 : vector<32xf32> to vector<1x32xf32>
    %167 = vector.broadcast %166 : vector<1x32xf32> to vector<8x32xf32>
    %168 = arith.addf %165, %167 : vector<8x32xf32>
    %c0_52 = arith.constant 0 : index
    %c0_53 = arith.constant 0 : index
    %c0_54 = arith.constant 0 : index
    %169 = vector.load %arg6[%c0_52, %c0_53, %c0_54] : memref<2x32x64xf32, #tpu.memory_space<vmem>>, vector<1x32x64xf32>
    %170 = vector.shape_cast %169 : vector<1x32x64xf32> to vector<32x64xf32>
    %cst_55 = arith.constant dense<0.000000e+00> : vector<8x64xf32>
    %171 = tpu.matmul %168, %170, %cst_55 {dimension_numbers = #tpu.dot_dimension_numbers<[1], [0], [0], [1], [0, 0, 1, 1], [], []>} : vector<8x32xf32>, vector<32x64xf32>, vector<8x64xf32> -> vector<8x64xf32>
    %172 = vector.shape_cast %27 : vector<64xf32> to vector<1x64xf32>
    %173 = vector.broadcast %172 : vector<1x64xf32> to vector<8x64xf32>
    %174 = arith.addf %171, %173 : vector<8x64xf32>
    %cst_56 = arith.constant 0.000000e+00 : f32
    %175 = vector.broadcast %cst_56 : f32 to vector<8x64xf32>
    %176 = arith.maximumf %174, %175 : vector<8x64xf32>
    %c0_57 = arith.constant 0 : index
    %c0_58 = arith.constant 0 : index
    %c0_59 = arith.constant 0 : index
    %177 = vector.load %arg7[%c0_57, %c0_58, %c0_59] : memref<2x64x32xf32, #tpu.memory_space<vmem>>, vector<1x64x32xf32>
    %178 = vector.shape_cast %177 : vector<1x64x32xf32> to vector<64x32xf32>
    %cst_60 = arith.constant dense<0.000000e+00> : vector<8x32xf32>
    %179 = tpu.matmul %176, %178, %cst_60 {dimension_numbers = #tpu.dot_dimension_numbers<[1], [0], [0], [1], [0, 0, 1, 1], [], []>} : vector<8x64xf32>, vector<64x32xf32>, vector<8x32xf32> -> vector<8x32xf32>
    %180 = vector.shape_cast %29 : vector<32xf32> to vector<1x32xf32>
    %181 = vector.broadcast %180 : vector<1x32xf32> to vector<8x32xf32>
    %182 = arith.addf %179, %181 : vector<8x32xf32>
    %183 = arith.addf %168, %182 : vector<8x32xf32>
    %cst_61 = arith.constant dense<0.000000e+00> : vector<8xf32>
    %184 = vector.multi_reduction <add>, %183, %cst_61 [1] : vector<8x32xf32> to vector<8xf32>
    %185 = vector.shape_cast %184 : vector<8xf32> to vector<8x1xf32>
    %cst_62 = arith.constant 3.200000e+01 : f32
    %186 = vector.broadcast %cst_62 : f32 to vector<8x1xf32>
    %187 = arith.divf %185, %186 : vector<8x1xf32>
    %188 = vector.broadcast %187 : vector<8x1xf32> to vector<8x32xf32>
    %189 = arith.subf %183, %188 : vector<8x32xf32>
    %190 = arith.mulf %189, %189 : vector<8x32xf32>
    %cst_63 = arith.constant dense<0.000000e+00> : vector<8xf32>
    %191 = vector.multi_reduction <add>, %190, %cst_63 [1] : vector<8x32xf32> to vector<8xf32>
    %192 = vector.shape_cast %191 : vector<8xf32> to vector<8x1xf32>
    %cst_64 = arith.constant 3.200000e+01 : f32
    %193 = vector.broadcast %cst_64 : f32 to vector<8x1xf32>
    %194 = arith.divf %192, %193 : vector<8x1xf32>
    %195 = vector.broadcast %187 : vector<8x1xf32> to vector<8x32xf32>
    %196 = arith.subf %183, %195 : vector<8x32xf32>
    %cst_65 = arith.constant 9.99999974E-6 : f32
    %197 = vector.broadcast %cst_65 : f32 to vector<8x1xf32>
    %198 = arith.addf %194, %197 : vector<8x1xf32>
    %199 = math.rsqrt %198 : vector<8x1xf32>
    %200 = vector.broadcast %199 : vector<8x1xf32> to vector<8x32xf32>
    %201 = arith.mulf %196, %200 : vector<8x32xf32>
    %202 = vector.shape_cast %23 : vector<32xf32> to vector<1x32xf32>
    %203 = vector.broadcast %202 : vector<1x32xf32> to vector<8x32xf32>
    %204 = arith.mulf %201, %203 : vector<8x32xf32>
    %205 = vector.shape_cast %25 : vector<32xf32> to vector<1x32xf32>
    %206 = vector.broadcast %205 : vector<1x32xf32> to vector<8x32xf32>
    %207 = arith.addf %204, %206 : vector<8x32xf32>
    %c1 = arith.constant 1 : index
    %c0_66 = arith.constant 0 : index
    %c0_67 = arith.constant 0 : index
    %208 = vector.load %arg4[%c1, %c0_66, %c0_67] : memref<2x32x128xf32, #tpu.memory_space<vmem>>, vector<1x32x128xf32>
    %209 = vector.shape_cast %208 : vector<1x32x128xf32> to vector<32x128xf32>
    %c1_68 = arith.constant 1 : index
    %c0_69 = arith.constant 0 : index
    %c0_70 = arith.constant 0 : index
    %210 = vector.load %arg5[%c1_68, %c0_69, %c0_70] : memref<2x8x128xf32, #tpu.memory_space<vmem>>, vector<1x8x128xf32>
    %211 = vector.shape_cast %210 : vector<1x8x128xf32> to vector<8x128xf32>
    %212 = vector.extract_strided_slice %211 {offsets = [0, 0], sizes = [1, 32], strides = [1, 1]} : vector<8x128xf32> to vector<1x32xf32>
    %213 = vector.shape_cast %212 : vector<1x32xf32> to vector<32xf32>
    %214 = vector.extract_strided_slice %211 {offsets = [0, 32], sizes = [1, 32], strides = [1, 1]} : vector<8x128xf32> to vector<1x32xf32>
    %215 = vector.shape_cast %214 : vector<1x32xf32> to vector<32xf32>
    %216 = vector.extract_strided_slice %211 {offsets = [0, 64], sizes = [1, 32], strides = [1, 1]} : vector<8x128xf32> to vector<1x32xf32>
    %217 = vector.shape_cast %216 : vector<1x32xf32> to vector<32xf32>
    %218 = vector.extract_strided_slice %211 {offsets = [0, 96], sizes = [1, 32], strides = [1, 1]} : vector<8x128xf32> to vector<1x32xf32>
    %219 = vector.shape_cast %218 : vector<1x32xf32> to vector<32xf32>
    %220 = vector.extract_strided_slice %211 {offsets = [1, 0], sizes = [1, 32], strides = [1, 1]} : vector<8x128xf32> to vector<1x32xf32>
    %221 = vector.shape_cast %220 : vector<1x32xf32> to vector<32xf32>
    %222 = vector.extract_strided_slice %211 {offsets = [1, 32], sizes = [1, 32], strides = [1, 1]} : vector<8x128xf32> to vector<1x32xf32>
    %223 = vector.shape_cast %222 : vector<1x32xf32> to vector<32xf32>
    %224 = vector.extract_strided_slice %211 {offsets = [1, 64], sizes = [1, 32], strides = [1, 1]} : vector<8x128xf32> to vector<1x32xf32>
    %225 = vector.shape_cast %224 : vector<1x32xf32> to vector<32xf32>
    %226 = vector.extract_strided_slice %211 {offsets = [1, 96], sizes = [1, 32], strides = [1, 1]} : vector<8x128xf32> to vector<1x32xf32>
    %227 = vector.shape_cast %226 : vector<1x32xf32> to vector<32xf32>
    %228 = vector.extract_strided_slice %211 {offsets = [2, 0], sizes = [1, 64], strides = [1, 1]} : vector<8x128xf32> to vector<1x64xf32>
    %229 = vector.shape_cast %228 : vector<1x64xf32> to vector<64xf32>
    %230 = vector.extract_strided_slice %211 {offsets = [2, 64], sizes = [1, 32], strides = [1, 1]} : vector<8x128xf32> to vector<1x32xf32>
    %231 = vector.shape_cast %230 : vector<1x32xf32> to vector<32xf32>
    %232 = vector.extract_strided_slice %209 {offsets = [0, 0], sizes = [32, 32], strides = [1, 1]} : vector<32x128xf32> to vector<32x32xf32>
    %cst_71 = arith.constant dense<0.000000e+00> : vector<8x32xf32>
    %233 = tpu.matmul %207, %232, %cst_71 {dimension_numbers = #tpu.dot_dimension_numbers<[1], [0], [0], [1], [0, 0, 1, 1], [], []>} : vector<8x32xf32>, vector<32x32xf32>, vector<8x32xf32> -> vector<8x32xf32>
    %234 = vector.shape_cast %213 : vector<32xf32> to vector<1x32xf32>
    %235 = vector.broadcast %234 : vector<1x32xf32> to vector<8x32xf32>
    %236 = arith.addf %233, %235 : vector<8x32xf32>
    %237 = vector.extract_strided_slice %209 {offsets = [0, 32], sizes = [32, 32], strides = [1, 1]} : vector<32x128xf32> to vector<32x32xf32>
    %cst_72 = arith.constant dense<0.000000e+00> : vector<8x32xf32>
    %238 = tpu.matmul %3, %237, %cst_72 {dimension_numbers = #tpu.dot_dimension_numbers<[1], [0], [0], [1], [0, 0, 1, 1], [], []>} : vector<8x32xf32>, vector<32x32xf32>, vector<8x32xf32> -> vector<8x32xf32>
    %239 = vector.shape_cast %215 : vector<32xf32> to vector<1x32xf32>
    %240 = vector.broadcast %239 : vector<1x32xf32> to vector<8x32xf32>
    %241 = arith.addf %238, %240 : vector<8x32xf32>
    %242 = vector.extract_strided_slice %209 {offsets = [0, 64], sizes = [32, 32], strides = [1, 1]} : vector<32x128xf32> to vector<32x32xf32>
    %cst_73 = arith.constant dense<0.000000e+00> : vector<8x32xf32>
    %243 = tpu.matmul %5, %242, %cst_73 {dimension_numbers = #tpu.dot_dimension_numbers<[1], [0], [0], [1], [0, 0, 1, 1], [], []>} : vector<8x32xf32>, vector<32x32xf32>, vector<8x32xf32> -> vector<8x32xf32>
    %244 = vector.shape_cast %217 : vector<32xf32> to vector<1x32xf32>
    %245 = vector.broadcast %244 : vector<1x32xf32> to vector<8x32xf32>
    %246 = arith.addf %243, %245 : vector<8x32xf32>
    %247 = vector.extract_strided_slice %209 {offsets = [0, 96], sizes = [32, 32], strides = [1, 1]} : vector<32x128xf32> to vector<32x32xf32>
    %cst_74 = arith.constant 0.000000e+00 : f32
    %248 = vector.broadcast %cst_74 : f32 to vector<8x32xf32>
    %cst_75 = arith.constant 0.000000e+00 : f32
    %249 = vector.broadcast %cst_75 : f32 to vector<8x8xf32>
    %250 = vector.extract_strided_slice %236 {offsets = [0, 0], sizes = [8, 8], strides = [1, 1]} : vector<8x32xf32> to vector<8x8xf32>
    %251 = vector.extract_strided_slice %241 {offsets = [0, 0], sizes = [8, 8], strides = [1, 1]} : vector<8x32xf32> to vector<8x8xf32>
    %252 = tpu.transpose %251, [1, 0] : vector<8x8xf32> -> vector<8x8xf32>
    %cst_76 = arith.constant dense<0.000000e+00> : vector<8x8xf32>
    %253 = tpu.matmul %250, %252, %cst_76 {dimension_numbers = #tpu.dot_dimension_numbers<[1], [0], [0], [1], [0, 0, 1, 1], [], []>} : vector<8x8xf32>, vector<8x8xf32>, vector<8x8xf32> -> vector<8x8xf32>
    %cst_77 = arith.constant 0.353553385 : f32
    %254 = vector.broadcast %cst_77 : f32 to vector<8x8xf32>
    %255 = arith.mulf %253, %254 : vector<8x8xf32>
    %cst_78 = arith.constant dense<0xFF800000> : vector<8xf32>
    %256 = vector.multi_reduction <maximumf>, %255, %cst_78 [1] : vector<8x8xf32> to vector<8xf32>
    %257 = vector.shape_cast %256 : vector<8xf32> to vector<8x1xf32>
    %258 = vector.broadcast %257 : vector<8x1xf32> to vector<8x8xf32>
    %259 = arith.subf %255, %258 : vector<8x8xf32>
    %260 = math.exp %259 : vector<8x8xf32>
    %cst_79 = arith.constant dense<0.000000e+00> : vector<8xf32>
    %261 = vector.multi_reduction <add>, %260, %cst_79 [1] : vector<8x8xf32> to vector<8xf32>
    %262 = vector.shape_cast %261 : vector<8xf32> to vector<8x1xf32>
    %263 = tpu.reciprocal %262 {approx = true} : vector<8x1xf32> -> vector<8x1xf32>
    %264 = vector.broadcast %263 : vector<8x1xf32> to vector<8x8xf32>
    %265 = arith.mulf %260, %264 : vector<8x8xf32>
    %266 = arith.addf %249, %265 : vector<8x8xf32>
    %267 = vector.extract_strided_slice %246 {offsets = [0, 0], sizes = [8, 8], strides = [1, 1]} : vector<8x32xf32> to vector<8x8xf32>
    %cst_80 = arith.constant dense<0.000000e+00> : vector<8x8xf32>
    %268 = tpu.matmul %265, %267, %cst_80 {dimension_numbers = #tpu.dot_dimension_numbers<[1], [0], [0], [1], [0, 0, 1, 1], [], []>} : vector<8x8xf32>, vector<8x8xf32>, vector<8x8xf32> -> vector<8x8xf32>
    %269 = vector.extract_strided_slice %247 {offsets = [0, 0], sizes = [8, 32], strides = [1, 1]} : vector<32x32xf32> to vector<8x32xf32>
    %cst_81 = arith.constant dense<0.000000e+00> : vector<8x32xf32>
    %270 = tpu.matmul %268, %269, %cst_81 {dimension_numbers = #tpu.dot_dimension_numbers<[1], [0], [0], [1], [0, 0, 1, 1], [], []>} : vector<8x8xf32>, vector<8x32xf32>, vector<8x32xf32> -> vector<8x32xf32>
    %271 = arith.addf %248, %270 : vector<8x32xf32>
    %272 = vector.extract_strided_slice %236 {offsets = [0, 8], sizes = [8, 8], strides = [1, 1]} : vector<8x32xf32> to vector<8x8xf32>
    %273 = vector.extract_strided_slice %241 {offsets = [0, 8], sizes = [8, 8], strides = [1, 1]} : vector<8x32xf32> to vector<8x8xf32>
    %274 = tpu.transpose %273, [1, 0] : vector<8x8xf32> -> vector<8x8xf32>
    %cst_82 = arith.constant dense<0.000000e+00> : vector<8x8xf32>
    %275 = tpu.matmul %272, %274, %cst_82 {dimension_numbers = #tpu.dot_dimension_numbers<[1], [0], [0], [1], [0, 0, 1, 1], [], []>} : vector<8x8xf32>, vector<8x8xf32>, vector<8x8xf32> -> vector<8x8xf32>
    %cst_83 = arith.constant 0.353553385 : f32
    %276 = vector.broadcast %cst_83 : f32 to vector<8x8xf32>
    %277 = arith.mulf %275, %276 : vector<8x8xf32>
    %cst_84 = arith.constant dense<0xFF800000> : vector<8xf32>
    %278 = vector.multi_reduction <maximumf>, %277, %cst_84 [1] : vector<8x8xf32> to vector<8xf32>
    %279 = vector.shape_cast %278 : vector<8xf32> to vector<8x1xf32>
    %280 = vector.broadcast %279 : vector<8x1xf32> to vector<8x8xf32>
    %281 = arith.subf %277, %280 : vector<8x8xf32>
    %282 = math.exp %281 : vector<8x8xf32>
    %cst_85 = arith.constant dense<0.000000e+00> : vector<8xf32>
    %283 = vector.multi_reduction <add>, %282, %cst_85 [1] : vector<8x8xf32> to vector<8xf32>
    %284 = vector.shape_cast %283 : vector<8xf32> to vector<8x1xf32>
    %285 = tpu.reciprocal %284 {approx = true} : vector<8x1xf32> -> vector<8x1xf32>
    %286 = vector.broadcast %285 : vector<8x1xf32> to vector<8x8xf32>
    %287 = arith.mulf %282, %286 : vector<8x8xf32>
    %288 = arith.addf %266, %287 : vector<8x8xf32>
    %289 = vector.extract_strided_slice %246 {offsets = [0, 8], sizes = [8, 8], strides = [1, 1]} : vector<8x32xf32> to vector<8x8xf32>
    %cst_86 = arith.constant dense<0.000000e+00> : vector<8x8xf32>
    %290 = tpu.matmul %287, %289, %cst_86 {dimension_numbers = #tpu.dot_dimension_numbers<[1], [0], [0], [1], [0, 0, 1, 1], [], []>} : vector<8x8xf32>, vector<8x8xf32>, vector<8x8xf32> -> vector<8x8xf32>
    %291 = vector.extract_strided_slice %247 {offsets = [8, 0], sizes = [8, 32], strides = [1, 1]} : vector<32x32xf32> to vector<8x32xf32>
    %cst_87 = arith.constant dense<0.000000e+00> : vector<8x32xf32>
    %292 = tpu.matmul %290, %291, %cst_87 {dimension_numbers = #tpu.dot_dimension_numbers<[1], [0], [0], [1], [0, 0, 1, 1], [], []>} : vector<8x8xf32>, vector<8x32xf32>, vector<8x32xf32> -> vector<8x32xf32>
    %293 = arith.addf %271, %292 : vector<8x32xf32>
    %294 = vector.extract_strided_slice %236 {offsets = [0, 16], sizes = [8, 8], strides = [1, 1]} : vector<8x32xf32> to vector<8x8xf32>
    %295 = vector.extract_strided_slice %241 {offsets = [0, 16], sizes = [8, 8], strides = [1, 1]} : vector<8x32xf32> to vector<8x8xf32>
    %296 = tpu.transpose %295, [1, 0] : vector<8x8xf32> -> vector<8x8xf32>
    %cst_88 = arith.constant dense<0.000000e+00> : vector<8x8xf32>
    %297 = tpu.matmul %294, %296, %cst_88 {dimension_numbers = #tpu.dot_dimension_numbers<[1], [0], [0], [1], [0, 0, 1, 1], [], []>} : vector<8x8xf32>, vector<8x8xf32>, vector<8x8xf32> -> vector<8x8xf32>
    %cst_89 = arith.constant 0.353553385 : f32
    %298 = vector.broadcast %cst_89 : f32 to vector<8x8xf32>
    %299 = arith.mulf %297, %298 : vector<8x8xf32>
    %cst_90 = arith.constant dense<0xFF800000> : vector<8xf32>
    %300 = vector.multi_reduction <maximumf>, %299, %cst_90 [1] : vector<8x8xf32> to vector<8xf32>
    %301 = vector.shape_cast %300 : vector<8xf32> to vector<8x1xf32>
    %302 = vector.broadcast %301 : vector<8x1xf32> to vector<8x8xf32>
    %303 = arith.subf %299, %302 : vector<8x8xf32>
    %304 = math.exp %303 : vector<8x8xf32>
    %cst_91 = arith.constant dense<0.000000e+00> : vector<8xf32>
    %305 = vector.multi_reduction <add>, %304, %cst_91 [1] : vector<8x8xf32> to vector<8xf32>
    %306 = vector.shape_cast %305 : vector<8xf32> to vector<8x1xf32>
    %307 = tpu.reciprocal %306 {approx = true} : vector<8x1xf32> -> vector<8x1xf32>
    %308 = vector.broadcast %307 : vector<8x1xf32> to vector<8x8xf32>
    %309 = arith.mulf %304, %308 : vector<8x8xf32>
    %310 = arith.addf %288, %309 : vector<8x8xf32>
    %311 = vector.extract_strided_slice %246 {offsets = [0, 16], sizes = [8, 8], strides = [1, 1]} : vector<8x32xf32> to vector<8x8xf32>
    %cst_92 = arith.constant dense<0.000000e+00> : vector<8x8xf32>
    %312 = tpu.matmul %309, %311, %cst_92 {dimension_numbers = #tpu.dot_dimension_numbers<[1], [0], [0], [1], [0, 0, 1, 1], [], []>} : vector<8x8xf32>, vector<8x8xf32>, vector<8x8xf32> -> vector<8x8xf32>
    %313 = vector.extract_strided_slice %247 {offsets = [16, 0], sizes = [8, 32], strides = [1, 1]} : vector<32x32xf32> to vector<8x32xf32>
    %cst_93 = arith.constant dense<0.000000e+00> : vector<8x32xf32>
    %314 = tpu.matmul %312, %313, %cst_93 {dimension_numbers = #tpu.dot_dimension_numbers<[1], [0], [0], [1], [0, 0, 1, 1], [], []>} : vector<8x8xf32>, vector<8x32xf32>, vector<8x32xf32> -> vector<8x32xf32>
    %315 = arith.addf %293, %314 : vector<8x32xf32>
    %316 = vector.extract_strided_slice %236 {offsets = [0, 24], sizes = [8, 8], strides = [1, 1]} : vector<8x32xf32> to vector<8x8xf32>
    %317 = vector.extract_strided_slice %241 {offsets = [0, 24], sizes = [8, 8], strides = [1, 1]} : vector<8x32xf32> to vector<8x8xf32>
    %318 = tpu.transpose %317, [1, 0] : vector<8x8xf32> -> vector<8x8xf32>
    %cst_94 = arith.constant dense<0.000000e+00> : vector<8x8xf32>
    %319 = tpu.matmul %316, %318, %cst_94 {dimension_numbers = #tpu.dot_dimension_numbers<[1], [0], [0], [1], [0, 0, 1, 1], [], []>} : vector<8x8xf32>, vector<8x8xf32>, vector<8x8xf32> -> vector<8x8xf32>
    %cst_95 = arith.constant 0.353553385 : f32
    %320 = vector.broadcast %cst_95 : f32 to vector<8x8xf32>
    %321 = arith.mulf %319, %320 : vector<8x8xf32>
    %cst_96 = arith.constant dense<0xFF800000> : vector<8xf32>
    %322 = vector.multi_reduction <maximumf>, %321, %cst_96 [1] : vector<8x8xf32> to vector<8xf32>
    %323 = vector.shape_cast %322 : vector<8xf32> to vector<8x1xf32>
    %324 = vector.broadcast %323 : vector<8x1xf32> to vector<8x8xf32>
    %325 = arith.subf %321, %324 : vector<8x8xf32>
    %326 = math.exp %325 : vector<8x8xf32>
    %cst_97 = arith.constant dense<0.000000e+00> : vector<8xf32>
    %327 = vector.multi_reduction <add>, %326, %cst_97 [1] : vector<8x8xf32> to vector<8xf32>
    %328 = vector.shape_cast %327 : vector<8xf32> to vector<8x1xf32>
    %329 = tpu.reciprocal %328 {approx = true} : vector<8x1xf32> -> vector<8x1xf32>
    %330 = vector.broadcast %329 : vector<8x1xf32> to vector<8x8xf32>
    %331 = arith.mulf %326, %330 : vector<8x8xf32>
    %332 = arith.addf %310, %331 : vector<8x8xf32>
    %333 = vector.extract_strided_slice %246 {offsets = [0, 24], sizes = [8, 8], strides = [1, 1]} : vector<8x32xf32> to vector<8x8xf32>
    %cst_98 = arith.constant dense<0.000000e+00> : vector<8x8xf32>
    %334 = tpu.matmul %331, %333, %cst_98 {dimension_numbers = #tpu.dot_dimension_numbers<[1], [0], [0], [1], [0, 0, 1, 1], [], []>} : vector<8x8xf32>, vector<8x8xf32>, vector<8x8xf32> -> vector<8x8xf32>
    %335 = vector.extract_strided_slice %247 {offsets = [24, 0], sizes = [8, 32], strides = [1, 1]} : vector<32x32xf32> to vector<8x32xf32>
    %cst_99 = arith.constant dense<0.000000e+00> : vector<8x32xf32>
    %336 = tpu.matmul %334, %335, %cst_99 {dimension_numbers = #tpu.dot_dimension_numbers<[1], [0], [0], [1], [0, 0, 1, 1], [], []>} : vector<8x8xf32>, vector<8x32xf32>, vector<8x32xf32> -> vector<8x32xf32>
    %337 = arith.addf %315, %336 : vector<8x32xf32>
    %338 = vector.shape_cast %219 : vector<32xf32> to vector<1x32xf32>
    %339 = vector.broadcast %338 : vector<1x32xf32> to vector<8x32xf32>
    %340 = arith.addf %337, %339 : vector<8x32xf32>
    %cst_100 = arith.constant 2.500000e-01 : f32
    %341 = vector.broadcast %cst_100 : f32 to vector<8x8xf32>
    %342 = arith.mulf %332, %341 : vector<8x8xf32>
    %c1_101 = arith.constant 1 : index
    %c0_102 = arith.constant 0 : index
    %c0_103 = arith.constant 0 : index
    %c0_104 = arith.constant 0 : index
    %343 = vector.load %arg9[%c1_101, %c0_102, %c0_103, %c0_104] : memref<2x1x8x8xf32, #tpu.memory_space<vmem>>, vector<1x1x8x8xf32>
    %344 = vector.shape_cast %343 : vector<1x1x8x8xf32> to vector<8x8xf32>
    %345 = vector.shape_cast %342 : vector<8x8xf32> to vector<1x1x8x8xf32>
    tpu.vector_store %arg9[%c1_101, %c0_102, %c0_103, %c0_104], %345 {strides = array<i32>} : memref<2x1x8x8xf32, #tpu.memory_space<vmem>>, vector<1x1x8x8xf32>,
    %346 = arith.addf %207, %340 : vector<8x32xf32>
    %cst_105 = arith.constant dense<0.000000e+00> : vector<8xf32>
    %347 = vector.multi_reduction <add>, %346, %cst_105 [1] : vector<8x32xf32> to vector<8xf32>
    %348 = vector.shape_cast %347 : vector<8xf32> to vector<8x1xf32>
    %cst_106 = arith.constant 3.200000e+01 : f32
    %349 = vector.broadcast %cst_106 : f32 to vector<8x1xf32>
    %350 = arith.divf %348, %349 : vector<8x1xf32>
    %351 = vector.broadcast %350 : vector<8x1xf32> to vector<8x32xf32>
    %352 = arith.subf %346, %351 : vector<8x32xf32>
    %353 = arith.mulf %352, %352 : vector<8x32xf32>
    %cst_107 = arith.constant dense<0.000000e+00> : vector<8xf32>
    %354 = vector.multi_reduction <add>, %353, %cst_107 [1] : vector<8x32xf32> to vector<8xf32>
    %355 = vector.shape_cast %354 : vector<8xf32> to vector<8x1xf32>
    %cst_108 = arith.constant 3.200000e+01 : f32
    %356 = vector.broadcast %cst_108 : f32 to vector<8x1xf32>
    %357 = arith.divf %355, %356 : vector<8x1xf32>
    %358 = vector.broadcast %350 : vector<8x1xf32> to vector<8x32xf32>
    %359 = arith.subf %346, %358 : vector<8x32xf32>
    %cst_109 = arith.constant 9.99999974E-6 : f32
    %360 = vector.broadcast %cst_109 : f32 to vector<8x1xf32>
    %361 = arith.addf %357, %360 : vector<8x1xf32>
    %362 = math.rsqrt %361 : vector<8x1xf32>
    %363 = vector.broadcast %362 : vector<8x1xf32> to vector<8x32xf32>
    %364 = arith.mulf %359, %363 : vector<8x32xf32>
    %365 = vector.shape_cast %221 : vector<32xf32> to vector<1x32xf32>
    %366 = vector.broadcast %365 : vector<1x32xf32> to vector<8x32xf32>
    %367 = arith.mulf %364, %366 : vector<8x32xf32>
    %368 = vector.shape_cast %223 : vector<32xf32> to vector<1x32xf32>
    %369 = vector.broadcast %368 : vector<1x32xf32> to vector<8x32xf32>
    %370 = arith.addf %367, %369 : vector<8x32xf32>
    %c1_110 = arith.constant 1 : index
    %c0_111 = arith.constant 0 : index
    %c0_112 = arith.constant 0 : index
    %371 = vector.load %arg6[%c1_110, %c0_111, %c0_112] : memref<2x32x64xf32, #tpu.memory_space<vmem>>, vector<1x32x64xf32>
    %372 = vector.shape_cast %371 : vector<1x32x64xf32> to vector<32x64xf32>
    %cst_113 = arith.constant dense<0.000000e+00> : vector<8x64xf32>
    %373 = tpu.matmul %370, %372, %cst_113 {dimension_numbers = #tpu.dot_dimension_numbers<[1], [0], [0], [1], [0, 0, 1, 1], [], []>} : vector<8x32xf32>, vector<32x64xf32>, vector<8x64xf32> -> vector<8x64xf32>
    %374 = vector.shape_cast %229 : vector<64xf32> to vector<1x64xf32>
    %375 = vector.broadcast %374 : vector<1x64xf32> to vector<8x64xf32>
    %376 = arith.addf %373, %375 : vector<8x64xf32>
    %cst_114 = arith.constant 0.000000e+00 : f32
    %377 = vector.broadcast %cst_114 : f32 to vector<8x64xf32>
    %378 = arith.maximumf %376, %377 : vector<8x64xf32>
    %c1_115 = arith.constant 1 : index
    %c0_116 = arith.constant 0 : index
    %c0_117 = arith.constant 0 : index
    %379 = vector.load %arg7[%c1_115, %c0_116, %c0_117] : memref<2x64x32xf32, #tpu.memory_space<vmem>>, vector<1x64x32xf32>
    %380 = vector.shape_cast %379 : vector<1x64x32xf32> to vector<64x32xf32>
    %cst_118 = arith.constant dense<0.000000e+00> : vector<8x32xf32>
    %381 = tpu.matmul %378, %380, %cst_118 {dimension_numbers = #tpu.dot_dimension_numbers<[1], [0], [0], [1], [0, 0, 1, 1], [], []>} : vector<8x64xf32>, vector<64x32xf32>, vector<8x32xf32> -> vector<8x32xf32>
    %382 = vector.shape_cast %231 : vector<32xf32> to vector<1x32xf32>
    %383 = vector.broadcast %382 : vector<1x32xf32> to vector<8x32xf32>
    %384 = arith.addf %381, %383 : vector<8x32xf32>
    %385 = arith.addf %370, %384 : vector<8x32xf32>
    %cst_119 = arith.constant dense<0.000000e+00> : vector<8xf32>
    %386 = vector.multi_reduction <add>, %385, %cst_119 [1] : vector<8x32xf32> to vector<8xf32>
    %387 = vector.shape_cast %386 : vector<8xf32> to vector<8x1xf32>
    %cst_120 = arith.constant 3.200000e+01 : f32
    %388 = vector.broadcast %cst_120 : f32 to vector<8x1xf32>
    %389 = arith.divf %387, %388 : vector<8x1xf32>
    %390 = vector.broadcast %389 : vector<8x1xf32> to vector<8x32xf32>
    %391 = arith.subf %385, %390 : vector<8x32xf32>
    %392 = arith.mulf %391, %391 : vector<8x32xf32>
    %cst_121 = arith.constant dense<0.000000e+00> : vector<8xf32>
    %393 = vector.multi_reduction <add>, %392, %cst_121 [1] : vector<8x32xf32> to vector<8xf32>
    %394 = vector.shape_cast %393 : vector<8xf32> to vector<8x1xf32>
    %cst_122 = arith.constant 3.200000e+01 : f32
    %395 = vector.broadcast %cst_122 : f32 to vector<8x1xf32>
    %396 = arith.divf %394, %395 : vector<8x1xf32>
    %397 = vector.broadcast %389 : vector<8x1xf32> to vector<8x32xf32>
    %398 = arith.subf %385, %397 : vector<8x32xf32>
    %cst_123 = arith.constant 9.99999974E-6 : f32
    %399 = vector.broadcast %cst_123 : f32 to vector<8x1xf32>
    %400 = arith.addf %396, %399 : vector<8x1xf32>
    %401 = math.rsqrt %400 : vector<8x1xf32>
    %402 = vector.broadcast %401 : vector<8x1xf32> to vector<8x32xf32>
    %403 = arith.mulf %398, %402 : vector<8x32xf32>
    %404 = vector.shape_cast %225 : vector<32xf32> to vector<1x32xf32>
    %405 = vector.broadcast %404 : vector<1x32xf32> to vector<8x32xf32>
    %406 = arith.mulf %403, %405 : vector<8x32xf32>
    %407 = vector.shape_cast %227 : vector<32xf32> to vector<1x32xf32>
    %408 = vector.broadcast %407 : vector<1x32xf32> to vector<8x32xf32>
    %409 = arith.addf %406, %408 : vector<8x32xf32>
    %c0_124 = arith.constant 0 : index
    %c0_125 = arith.constant 0 : index
    %c0_126 = arith.constant 0 : index
    %410 = vector.load %arg8[%c0_124, %c0_125, %c0_126] : memref<1x8x32xf32, #tpu.memory_space<vmem>>, vector<1x8x32xf32>
    %411 = vector.shape_cast %410 : vector<1x8x32xf32> to vector<8x32xf32>
    %412 = vector.shape_cast %409 : vector<8x32xf32> to vector<1x8x32xf32>
    tpu.vector_store %arg8[%c0_124, %c0_125, %c0_126], %412 {strides = array<i32>} : memref<1x8x32xf32, #tpu.memory_space<vmem>>, vector<1x8x32xf32>,
    return
  }
  func.func @transform_0(%arg0: i32) -> (i32, i32, i32) {
    %c0_i32 = arith.constant 0 : i32
    %c0_i32_0 = arith.constant 0 : i32
    %c0_i32_1 = arith.constant 0 : i32
    return %arg0, %c0_i32, %c0_i32_0 : i32, i32, i32
  }
  func.func @transform_1(%arg0: i32) -> (i32, i32, i32) {
    %c0_i32 = arith.constant 0 : i32
    %c0_i32_0 = arith.constant 0 : i32
    %c0_i32_1 = arith.constant 0 : i32
    return %arg0, %c0_i32, %c0_i32_0 : i32, i32, i32
  }
  func.func @transform_2(%arg0: i32) -> (i32, i32, i32) {
    %c0_i32 = arith.constant 0 : i32
    %c0_i32_0 = arith.constant 0 : i32
    %c0_i32_1 = arith.constant 0 : i32
    return %arg0, %c0_i32, %c0_i32_0 : i32, i32, i32
  }
  func.func @transform_3(%arg0: i32) -> (i32, i32, i32) {
    %c0_i32 = arith.constant 0 : i32
    %c0_i32_0 = arith.constant 0 : i32
    %c0_i32_1 = arith.constant 0 : i32
    %c0_i32_2 = arith.constant 0 : i32
    return %c0_i32, %c0_i32_0, %c0_i32_1 : i32, i32, i32
  }
  func.func @transform_4(%arg0: i32) -> (i32, i32, i32) {
    %c0_i32 = arith.constant 0 : i32
    %c0_i32_0 = arith.constant 0 : i32
    %c0_i32_1 = arith.constant 0 : i32
    %c0_i32_2 = arith.constant 0 : i32
    return %c0_i32, %c0_i32_0, %c0_i32_1 : i32, i32, i32
  }
  func.func @transform_5(%arg0: i32) -> (i32, i32, i32) {
    %c0_i32 = arith.constant 0 : i32
    %c0_i32_0 = arith.constant 0 : i32
    %c0_i32_1 = arith.constant 0 : i32
    %c0_i32_2 = arith.constant 0 : i32
    return %c0_i32, %c0_i32_0, %c0_i32_1 : i32, i32, i32
  }
  func.func @transform_6(%arg0: i32) -> (i32, i32, i32) {
    %c0_i32 = arith.constant 0 : i32
    %c0_i32_0 = arith.constant 0 : i32
    %c0_i32_1 = arith.constant 0 : i32
    %c0_i32_2 = arith.constant 0 : i32
    return %c0_i32, %c0_i32_0, %c0_i32_1 : i32, i32, i32
  }
  func.func @transform_7(%arg0: i32) -> (i32, i32, i32) {
    %c0_i32 = arith.constant 0 : i32
    %c0_i32_0 = arith.constant 0 : i32
    %c0_i32_1 = arith.constant 0 : i32
    return %arg0, %c0_i32, %c0_i32_0 : i32, i32, i32
  }
  func.func @transform_8(%arg0: i32) -> (i32, i32, i32, i32) {
    %c0_i32 = arith.constant 0 : i32
    %c0_i32_0 = arith.constant 0 : i32
    %c0_i32_1 = arith.constant 0 : i32
    %c0_i32_2 = arith.constant 0 : i32
    return %c0_i32, %arg0, %c0_i32_0, %c0_i32_1 : i32, i32, i32, i32
  }
}

</mosaic_0001>

<llo_original>
// kernel: tpu_custom_call.1
$region0: #{tpu_custom_call.1}
  #allocation0 [shape = 'u32[]', space=smem, size = 0x4, offset = 0x4, fixed_abs, tag = 'smem constant byte address 0x4 - core index']
  #allocation1 [shape = 'u32[72,128]{1,0:T(1,128)}', space=vmem, size = 0x9000, scoped, tag = 'internal scratch']
  %s0 = inlined_call_operand.vmem [shape: f32[2,8,32], index: 0, kind: input, shape index: {}]
  %s1 = inlined_call_operand.vmem [shape: f32[2,8,32], index: 1, kind: input, shape index: {}]
  %s2 = inlined_call_operand.vmem [shape: f32[2,8,32], index: 2, kind: input, shape index: {}]
  %s3 = inlined_call_operand.vmem [shape: f32[2,32,128], index: 3, kind: input, shape index: {}]
  %s4 = inlined_call_operand.vmem [shape: f32[2,8,128], index: 4, kind: input, shape index: {}]
  %s5 = inlined_call_operand.vmem [shape: f32[2,32,64], index: 5, kind: input, shape index: {}]
  %s6 = inlined_call_operand.vmem [shape: f32[2,64,32], index: 6, kind: input, shape index: {}]
  %s7 = inlined_call_operand.hbm [shape: f32[2,8,32], index: 7, kind: output, shape index: {0}]
  %s8 = inlined_call_operand.hbm [shape: f32[2,2,8,8], index: 8, kind: output, shape index: {1}]
  %9 = xla_tuple %s7, %s8
  %s10 = sld [smem:[#allocation0]]
  $region69: #{tpu_custom_call.1} parent=0
    _
  %s12 = ssub.s32 1, %s10
  %s13 = scalar_select 0, %s12, %s10
  $region1: #{tpu_custom_call.1} parent=0
    #allocation2 [shape = 'u8[8192]{0}', space=vmem, size = 0x2000, scoped, tag = 'output window, operand 0']
    #allocation3 [shape = 's32[2]{0}', space=sflag, size = 0x8, scoped, tag = 'scoped memory for tpu_custom_call.1']
    #allocation4 [shape = 'u8[16384]{0}', space=vmem, size = 0x4000, scoped, tag = 'output window, operand 1']
    #allocation5 [shape = 's32[2]{0}', space=sflag, size = 0x8, scoped, tag = 'scoped memory for tpu_custom_call.1']
    %14 = vsyncpa [#allocation3], 0
    %s15 = scalar_lea.sflag [#allocation3], 1
    %16 = vsyncpa %s15, 0
    %17 = vsyncpa [#allocation5], 0
    %s18 = scalar_lea.sflag [#allocation5], 1
    %19 = vsyncpa %s18, 0
    loop: start=0, step=1, limit=4
    $region2: #{tpu_custom_call.1} parent=1 // loop_pre_header
      _
    $region3: #{tpu_custom_call.1} parent=1 // loop_header
      %s21 = sphi 0, %s25
      %p22 = scmp.ge.s32.totalorder %s21, 4
      %s31 = sphi 0, %s33
      %s34 = sphi 0, %s31
      %s35 = sphi 0, %s34
      %s51 = sphi 0, %s35
      %s57 = sphi 0, %s59
      %s60 = sphi 0, %s57
      %s61 = sphi 0, %s60
      %s77 = sphi 0, %s61
      %s83 = sphi 0, %s85
      %s86 = sphi 0, %s83
      %s87 = sphi 0, %s86
      %s103 = sphi 0, %s87
      %s107 = sphi 0, %s107
      %s109 = sphi 0, %s107
      %s110 = sphi 0, %s109
      %s124 = sphi 0, %s110
      %s128 = sphi 0, %s128
      %s130 = sphi 0, %s128
      %s131 = sphi 0, %s130
      %s145 = sphi 0, %s131
      %s149 = sphi 0, %s149
      %s151 = sphi 0, %s149
      %s152 = sphi 0, %s151
      %s166 = sphi 0, %s152
      %s170 = sphi 0, %s170
      %s172 = sphi 0, %s170
      %s173 = sphi 0, %s172
      %s187 = sphi 0, %s173
      %s193 = sphi 0, %s195
      %s196 = sphi 0, %s193
      %s197 = sphi 0, %s196
      %s213 = sphi 0, %s197
      %s219 = sphi 0, %s221
      %s222 = sphi 0, %s219
      %s223 = sphi 0, %s222
      %s239 = sphi 0, %s223
    $region4: #{tpu_custom_call.1} parent=1 // loop_header_branch
      %24 = sbr.rel (%p22) target = $region8
    $region5: #{tpu_custom_call.1} parent=1 // loop_body
      %s26 = ssub.s32 %s21, 1
      %s27 = ssub.s32 %s21, 2
      %s28 = sadd.s32 %s21, 1
      %s29 = ssub.s32 %s21, %s28
      %p30 = scmp.eq.s32.totalorder %s29, 0
      %s32 = sadd.s32 %s31, 1
      %s33 = scalar_select %p30, %s31, %s32
      %p36 = pneg %p30
      %p37 = scmp.eq.s32.totalorder %s21, 1
      %p38 = por %p36, %p37
      %p39 = scmp.ne.s32.totalorder %s31, %s34
      %p40 = scmp.eq.s32.totalorder %s21, 0
      %p41 = por %p39, %p40
      %p42 = scmp.ne.s32.totalorder %s31, %s34
      %p43 = scmp.eq.s32.totalorder %s26, 1
      %p44 = por %p42, %p43
      %p45 = scmp.ne.s32.totalorder %s34, %s35
      %p46 = scmp.eq.s32.totalorder %s26, 0
      %p47 = por %p45, %p46
      %p48 = scmp.ne.s32.totalorder %s34, %s35
      %p49 = scmp.eq.s32.totalorder %s27, 1
      %p50 = por %p48, %p49
      %p52 = scmp.ne.s32.totalorder %s35, %s51
      %p53 = scmp.eq.s32.totalorder %s27, 0
      %p54 = por %p52, %p53
      %s55 = ssub.s32 %s21, %s28
      %p56 = scmp.eq.s32.totalorder %s55, 0
      %s58 = sadd.s32 %s57, 1
      %s59 = scalar_select %p56, %s57, %s58
      %p62 = pneg %p56
      %p63 = scmp.eq.s32.totalorder %s21, 1
      %p64 = por %p62, %p63
      %p65 = scmp.ne.s32.totalorder %s57, %s60
      %p66 = scmp.eq.s32.totalorder %s21, 0
      %p67 = por %p65, %p66
      %p68 = scmp.ne.s32.totalorder %s57, %s60
      %p69 = scmp.eq.s32.totalorder %s26, 1
      %p70 = por %p68, %p69
      %p71 = scmp.ne.s32.totalorder %s60, %s61
      %p72 = scmp.eq.s32.totalorder %s26, 0
      %p73 = por %p71, %p72
      %p74 = scmp.ne.s32.totalorder %s60, %s61
      %p75 = scmp.eq.s32.totalorder %s27, 1
      %p76 = por %p74, %p75
      %p78 = scmp.ne.s32.totalorder %s61, %s77
      %p79 = scmp.eq.s32.totalorder %s27, 0
      %p80 = por %p78, %p79
      %s81 = ssub.s32 %s21, %s28
      %p82 = scmp.eq.s32.totalorder %s81, 0
      %s84 = sadd.s32 %s83, 1
      %s85 = scalar_select %p82, %s83, %s84
      %p88 = pneg %p82
      %p89 = scmp.eq.s32.totalorder %s21, 1
      %p90 = por %p88, %p89
      %p91 = scmp.ne.s32.totalorder %s83, %s86
      %p92 = scmp.eq.s32.totalorder %s21, 0
      %p93 = por %p91, %p92
      %p94 = scmp.ne.s32.totalorder %s83, %s86
      %p95 = scmp.eq.s32.totalorder %s26, 1
      %p96 = por %p94, %p95
      %p97 = scmp.ne.s32.totalorder %s86, %s87
      %p98 = scmp.eq.s32.totalorder %s26, 0
      %p99 = por %p97, %p98
      %p100 = scmp.ne.s32.totalorder %s86, %s87
      %p101 = scmp.eq.s32.totalorder %s27, 1
      %p102 = por %p100, %p101
      %p104 = scmp.ne.s32.totalorder %s87, %s103
      %p105 = scmp.eq.s32.totalorder %s27, 0
      %p106 = por %p104, %p105
      %s108 = sadd.s32 %s107, 1
      %p111 = scmp.eq.s32.totalorder %s21, 1
      %p112 = scmp.ne.s32.totalorder %s107, %s109
      %p113 = scmp.eq.s32.totalorder %s21, 0
      %p114 = por %p112, %p113
      %p115 = scmp.ne.s32.totalorder %s107, %s109
      %p116 = scmp.eq.s32.totalorder %s26, 1
      %p117 = por %p115, %p116
      %p118 = scmp.ne.s32.totalorder %s109, %s110
      %p119 = scmp.eq.s32.totalorder %s26, 0
      %p120 = por %p118, %p119
      %p121 = scmp.ne.s32.totalorder %s109, %s110
      %p122 = scmp.eq.s32.totalorder %s27, 1
      %p123 = por %p121, %p122
      %p125 = scmp.ne.s32.totalorder %s110, %s124
      %p126 = scmp.eq.s32.totalorder %s27, 0
      %p127 = por %p125, %p126
      %s129 = sadd.s32 %s128, 1
      %p132 = scmp.eq.s32.totalorder %s21, 1
      %p133 = scmp.ne.s32.totalorder %s128, %s130
      %p134 = scmp.eq.s32.totalorder %s21, 0
      %p135 = por %p133, %p134
      %p136 = scmp.ne.s32.totalorder %s128, %s130
      %p137 = scmp.eq.s32.totalorder %s26, 1
      %p138 = por %p136, %p137
      %p139 = scmp.ne.s32.totalorder %s130, %s131
      %p140 = scmp.eq.s32.totalorder %s26, 0
      %p141 = por %p139, %p140
      %p142 = scmp.ne.s32.totalorder %s130, %s131
      %p143 = scmp.eq.s32.totalorder %s27, 1
      %p144 = por %p142, %p143
      %p146 = scmp.ne.s32.totalorder %s131, %s145
      %p147 = scmp.eq.s32.totalorder %s27, 0
      %p148 = por %p146, %p147
      %s150 = sadd.s32 %s149, 1
      %p153 = scmp.eq.s32.totalorder %s21, 1
      %p154 = scmp.ne.s32.totalorder %s149, %s151
      %p155 = scmp.eq.s32.totalorder %s21, 0
      %p156 = por %p154, %p155
      %p157 = scmp.ne.s32.totalorder %s149, %s151
      %p158 = scmp.eq.s32.totalorder %s26, 1
      %p159 = por %p157, %p158
      %p160 = scmp.ne.s32.totalorder %s151, %s152
      %p161 = scmp.eq.s32.totalorder %s26, 0
      %p162 = por %p160, %p161
      %p163 = scmp.ne.s32.totalorder %s151, %s152
      %p164 = scmp.eq.s32.totalorder %s27, 1
      %p165 = por %p163, %p164
      %p167 = scmp.ne.s32.totalorder %s152, %s166
      %p168 = scmp.eq.s32.totalorder %s27, 0
      %p169 = por %p167, %p168
      %s171 = sadd.s32 %s170, 1
      %p174 = scmp.eq.s32.totalorder %s21, 1
      %p175 = scmp.ne.s32.totalorder %s170, %s172
      %p176 = scmp.eq.s32.totalorder %s21, 0
      %p177 = por %p175, %p176
      %p178 = scmp.ne.s32.totalorder %s170, %s172
      %p179 = scmp.eq.s32.totalorder %s26, 1
      %p180 = por %p178, %p179
      %p181 = scmp.ne.s32.totalorder %s172, %s173
      %p182 = scmp.eq.s32.totalorder %s26, 0
      %p183 = por %p181, %p182
      %p184 = scmp.ne.s32.totalorder %s172, %s173
      %p185 = scmp.eq.s32.totalorder %s27, 1
      %p186 = por %p184, %p185
      %p188 = scmp.ne.s32.totalorder %s173, %s187
      %p189 = scmp.eq.s32.totalorder %s27, 0
      %p190 = por %p188, %p189
      %s191 = ssub.s32 %s21, %s28
      %p192 = scmp.eq.s32.totalorder %s191, 0
      %s194 = sadd.s32 %s193, 1
      %s195 = scalar_select %p192, %s193, %s194
      %p198 = pneg %p192
      %p199 = scmp.eq.s32.totalorder %s21, 1
      %p200 = por %p198, %p199
      %p201 = scmp.ne.s32.totalorder %s193, %s196
      %p202 = scmp.eq.s32.totalorder %s21, 0
      %p203 = por %p201, %p202
      %p204 = scmp.ne.s32.totalorder %s193, %s196
      %p205 = scmp.eq.s32.totalorder %s26, 1
      %p206 = por %p204, %p205
      %p207 = scmp.ne.s32.totalorder %s196, %s197
      %p208 = scmp.eq.s32.totalorder %s26, 0
      %p209 = por %p207, %p208
      %p210 = scmp.ne.s32.totalorder %s196, %s197
      %p211 = scmp.eq.s32.totalorder %s27, 1
      %p212 = por %p210, %p211
      %p214 = scmp.ne.s32.totalorder %s197, %s213
      %p215 = scmp.eq.s32.totalorder %s27, 0
      %p216 = por %p214, %p215
      %s217 = ssub.s32 %s21, %s28
      %p218 = scmp.eq.s32.totalorder %s217, 0
      %s220 = sadd.s32 %s219, 1
      %s221 = scalar_select %p218, %s219, %s220
      %p224 = pneg %p218
      %p225 = scmp.eq.s32.totalorder %s21, 1
      %p226 = por %p224, %p225
      %p227 = scmp.ne.s32.totalorder %s219, %s222
      %p228 = scmp.eq.s32.totalorder %s21, 0
      %p229 = por %p227, %p228
      %p230 = scmp.ne.s32.totalorder %s219, %s222
      %p231 = scmp.eq.s32.totalorder %s26, 1
      %p232 = por %p230, %p231
      %p233 = scmp.ne.s32.totalorder %s222, %s223
      %p234 = scmp.eq.s32.totalorder %s26, 0
      %p235 = por %p233, %p234
      %p236 = scmp.ne.s32.totalorder %s222, %s223
      %p237 = scmp.eq.s32.totalorder %s27, 1
      %p238 = por %p236, %p237
      %p240 = scmp.ne.s32.totalorder %s223, %s239
      %p241 = scmp.eq.s32.totalorder %s27, 0
      %p242 = por %p240, %p241
      %p243 = scmp.le.s32.totalorder 1, %s21
      %p244 = scmp.lt.s32.totalorder %s21, 3
      %p245 = pnand %p243, %p244
      %p246 = pneg %p245
      // Predicated region
      $region9: #{tpu_custom_call.1} parent=5 // pred_check
        _
      $region10: #{tpu_custom_call.1} parent=5 // pred_check_branch
        %248 = sbr.rel (%p245) target = $region12
      $region11: #{tpu_custom_call.1} parent=5 // pred_region
        %s249 = ssub.s32 %s21, 1
        // Predicated region
        $region13: #{tpu_custom_call.1} parent=11 // pred_check
          %p250 = pneg %p120
        $region14: #{tpu_custom_call.1} parent=11 // pred_check_branch
          %252 = sbr.rel (%p250) target = $region16
        $region15: #{tpu_custom_call.1} parent=11 // pred_region
          _
        $region16: #{tpu_custom_call.1} parent=11 // pred_fallthru
          _
        // Predicated region
        $region17: #{tpu_custom_call.1} parent=11 // pred_check
          %p253 = pneg %p141
        $region18: #{tpu_custom_call.1} parent=11 // pred_check_branch
          %255 = sbr.rel (%p253) target = $region20
        $region19: #{tpu_custom_call.1} parent=11 // pred_region
          _
        $region20: #{tpu_custom_call.1} parent=11 // pred_fallthru
          _
        // Predicated region
        $region21: #{tpu_custom_call.1} parent=11 // pred_check
          %p256 = pneg %p162
        $region22: #{tpu_custom_call.1} parent=11 // pred_check_branch
          %258 = sbr.rel (%p256) target = $region24
        $region23: #{tpu_custom_call.1} parent=11 // pred_region
          _
        $region24: #{tpu_custom_call.1} parent=11 // pred_fallthru
          _
        // Predicated region
        $region25: #{tpu_custom_call.1} parent=11 // pred_check
          %p259 = pneg %p183
        $region26: #{tpu_custom_call.1} parent=11 // pred_check_branch
          %261 = sbr.rel (%p259) target = $region28
        $region27: #{tpu_custom_call.1} parent=11 // pred_region
          _
        $region28: #{tpu_custom_call.1} parent=11 // pred_fallthru
          _
      $region12: #{tpu_custom_call.1} parent=5 // pred_fallthru
        _
      %p262 = scmp.lt.s32.totalorder %s21, 2
      // Predicated region
      $region29: #{tpu_custom_call.1} parent=5 // pred_check
        %p263 = pneg %p262
      $region30: #{tpu_custom_call.1} parent=5 // pred_check_branch
        %265 = sbr.rel (%p263) target = $region32
      $region31: #{tpu_custom_call.1} parent=5 // pred_region
        // Predicated region
        $region33: #{tpu_custom_call.1} parent=31 // pred_check
          %p266 = pneg %p41
        $region34: #{tpu_custom_call.1} parent=31 // pred_check_branch
          %268 = sbr.rel (%p266) target = $region36
        $region35: #{tpu_custom_call.1} parent=31 // pred_region
          %p269 = scmp.lt.s32.totalorder %s21, 1
          %s270 = scalar_select %p269, %s21, 1
          %s271 = smul.addr %s270, 8
          %s272 = scalar_lea.vmem %s0, %s271
        $region36: #{tpu_custom_call.1} parent=31 // pred_fallthru
          _
        // Predicated region
        $region37: #{tpu_custom_call.1} parent=31 // pred_check
          %p273 = pneg %p67
        $region38: #{tpu_custom_call.1} parent=31 // pred_check_branch
          %275 = sbr.rel (%p273) target = $region40
        $region39: #{tpu_custom_call.1} parent=31 // pred_region
          %p276 = scmp.lt.s32.totalorder %s21, 1
          %s277 = scalar_select %p276, %s21, 1
          %s278 = smul.addr %s277, 8
          %s279 = scalar_lea.vmem %s1, %s278
        $region40: #{tpu_custom_call.1} parent=31 // pred_fallthru
          _
        // Predicated region
        $region41: #{tpu_custom_call.1} parent=31 // pred_check
          %p280 = pneg %p93
        $region42: #{tpu_custom_call.1} parent=31 // pred_check_branch
          %282 = sbr.rel (%p280) target = $region44
        $region43: #{tpu_custom_call.1} parent=31 // pred_region
          %p283 = scmp.lt.s32.totalorder %s21, 1
          %s284 = scalar_select %p283, %s21, 1
          %s285 = smul.addr %s284, 8
          %s286 = scalar_lea.vmem %s2, %s285
        $region44: #{tpu_custom_call.1} parent=31 // pred_fallthru
          _
      $region32: #{tpu_custom_call.1} parent=5 // pred_fallthru
        _
      %p287 = scmp.le.s32.totalorder 1, %s21
      %p288 = scmp.lt.s32.totalorder %s21, 3
      %p289 = pnand %p287, %p288
      %p290 = pneg %p289
      // Predicated region
      $region45: #{tpu_custom_call.1} parent=5 // pred_check
        _
      $region46: #{tpu_custom_call.1} parent=5 // pred_check_branch
        %292 = sbr.rel (%p289) target = $region48
      $region47: #{tpu_custom_call.1} parent=5 // pred_region
        %s293 = ssub.s32 %s21, 1
        %p294 = scmp.lt.s32.totalorder %s26, 1
        %s295 = scalar_select %p294, %s26, 1
        %s296 = smul.addr %s295, 8
        %s297 = scalar_lea.vmem %s0, %s296
        %p298 = pneg %p47
        %p299 = pneg %p44
        %p300 = scmp.lt.s32.totalorder %s26, 1
        %s301 = scalar_select %p300, %s26, 1
        %s302 = smul.addr %s301, 8
        %s303 = scalar_lea.vmem %s1, %s302
        %p304 = pneg %p73
        %p305 = pneg %p70
        %p306 = scmp.lt.s32.totalorder %s26, 1
        %s307 = scalar_select %p306, %s26, 1
        %s308 = smul.addr %s307, 8
        %s309 = scalar_lea.vmem %s2, %s308
        %p310 = pneg %p99
        %p311 = pneg %p96
        %p312 = pneg %p120
        %p313 = pneg %p117
        %p314 = pneg %p141
        %p315 = pneg %p138
        %p316 = pneg %p162
        %p317 = pneg %p159
        %p318 = pneg %p183
        %p319 = pneg %p180
        %p320 = pneg %p209
        %p321 = pneg %p206
        %s322 = sand.u32 %s196, 1
        %s323 = scalar_lea.sflag [#allocation3], %s322
        %s324 = sand.u32 %s196, 1
        %s325 = smul.addr %s324, 8
        %s326 = scalar_lea.vmem [#allocation2], %s325
        %p327 = pneg %p235
        %p328 = pneg %p232
        %s329 = sand.u32 %s222, 1
        %s330 = scalar_lea.sflag [#allocation5], %s329
        %s331 = sand.u32 %s222, 1
        %s332 = smul.addr %s331, 16
        %s333 = scalar_lea.vmem [#allocation4], %s332
        %p334 = scmp.lt.s32.totalorder %s26, 1
        %s335 = scalar_select %p334, %s26, 1
        %s336 = smul.addr %s335, 8
        %s337 = scalar_lea.vmem %s0, %s336
        %p338 = scmp.lt.s32.totalorder %s26, 1
        %s339 = scalar_select %p338, %s26, 1
        %s340 = smul.addr %s339, 8
        %s341 = scalar_lea.vmem %s1, %s340
        %p342 = scmp.lt.s32.totalorder %s26, 1
        %s343 = scalar_select %p342, %s26, 1
        %s344 = smul.addr %s343, 8
        %s345 = scalar_lea.vmem %s2, %s344
        %v346 = vld [vmem:[%s337] sm:$0xff]
        %v347 = vld [vmem:[%s341] sm:$0xff]
        %v348 = vld [vmem:[%s345] sm:$0xff]
        %v349 = vld [vmem:[%s3] sm:$0xff]
        %v350 = vld [vmem:[%s3 + $0x8] sm:$0xff]
        %v351 = vld [vmem:[%s3 + $0x10] sm:$0xff]
        %v352 = vld [vmem:[%s3 + $0x18] sm:$0xff]
        %v353 = vld [vmem:[%s4] sm:$0xff]
        %v354 = vperm.slane %v353, 0
        %vm355 = vcmask 261120
        %v357 = vsel %vm355, %v346, 0
        %359 = vmatpush.msra.mxu0 0.0
        %360 = vmatpush.msra.mxu0 0.0
        %361 = vmatpush.msra.mxu0 0.0
        %362 = vmatpush.msra.mxu0 0.0
        %363 = vmatpush.msra.mxu0 0.0
        %364 = vmatpush.msra.mxu0 0.0
        %365 = vmatpush.msra.mxu0 0.0
        %366 = vmatpush.msra.mxu0 0.0
        %367 = vmatpush.msra.mxu0 0.0
        %368 = vmatpush.msra.mxu0 0.0
        %369 = vmatpush.msra.mxu0 0.0
        %370 = vmatpush.msra.mxu0 0.0
        %371 = vmatpush.msra.mxu0 %v352
        %372 = vmatpush.msra.mxu0 %v351
        %373 = vmatpush.msra.mxu0 %v350
        %374 = vmatpush.msra.mxu0 %v349
        %375 = vmatmul.f32.gmra.mxu0 %v357
        %v376 = vpop.f32.mrf.mxu0
        %v377 = vadd.f32 %v354, %v376
        %378 = vdwg.mxu0
        %383 = vrot.lane.b32.xlu0 %v349, 96
        %v384 = vpop.permute.xlu0 %383
        %385 = vrot.lane.b32.xlu0 %v350, 96
        %v386 = vpop.permute.xlu0 %385
        %387 = vrot.lane.b32.xlu0 %v351, 96
        %v388 = vpop.permute.xlu0 %387
        %389 = vrot.lane.b32.xlu0 %v352, 96
        %v390 = vpop.permute.xlu0 %389
        %396 = vrot.lane.b32.xlu0 %v354, 96
        %v397 = vpop.permute.xlu0 %396
        %v400 = vsel %vm355, %v347, 0
        %402 = vmatpush.msra.mxu0 0.0
        %403 = vmatpush.msra.mxu0 0.0
        %404 = vmatpush.msra.mxu0 0.0
        %405 = vmatpush.msra.mxu0 0.0
        %406 = vmatpush.msra.mxu0 0.0
        %407 = vmatpush.msra.mxu0 0.0
        %408 = vmatpush.msra.mxu0 0.0
        %409 = vmatpush.msra.mxu0 0.0
        %410 = vmatpush.msra.mxu0 0.0
        %411 = vmatpush.msra.mxu0 0.0
        %412 = vmatpush.msra.mxu0 0.0
        %413 = vmatpush.msra.mxu0 0.0
        %414 = vmatpush.msra.mxu0 %v390
        %415 = vmatpush.msra.mxu0 %v388
        %416 = vmatpush.msra.mxu0 %v386
        %417 = vmatpush.msra.mxu0 %v384
        %418 = vmatmul.f32.gmra.mxu0 %v400
        %v419 = vpop.f32.mrf.mxu0
        %v420 = vadd.f32 %v397, %v419
        %421 = vdwg.mxu0
        %422 = vrot.lane.b32.xlu0 %v349, 64
        %v423 = vpop.permute.xlu0 %422
        %424 = vrot.lane.b32.xlu0 %v350, 64
        %v425 = vpop.permute.xlu0 %424
        %426 = vrot.lane.b32.xlu0 %v351, 64
        %v427 = vpop.permute.xlu0 %426
        %428 = vrot.lane.b32.xlu0 %v352, 64
        %v429 = vpop.permute.xlu0 %428
        %434 = vrot.lane.b32.xlu0 %v354, 64
        %v435 = vpop.permute.xlu0 %434
        %v438 = vsel %vm355, %v348, 0
        %440 = vmatpush.msra.mxu0 0.0
        %441 = vmatpush.msra.mxu0 0.0
        %442 = vmatpush.msra.mxu0 0.0
        %443 = vmatpush.msra.mxu0 0.0
        %444 = vmatpush.msra.mxu0 0.0
        %445 = vmatpush.msra.mxu0 0.0
        %446 = vmatpush.msra.mxu0 0.0
        %447 = vmatpush.msra.mxu0 0.0
        %448 = vmatpush.msra.mxu0 0.0
        %449 = vmatpush.msra.mxu0 0.0
        %450 = vmatpush.msra.mxu0 0.0
        %451 = vmatpush.msra.mxu0 0.0
        %452 = vmatpush.msra.mxu0 %v429
        %453 = vmatpush.msra.mxu0 %v427
        %454 = vmatpush.msra.mxu0 %v425
        %455 = vmatpush.msra.mxu0 %v423
        %456 = vmatmul.f32.gmra.mxu0 %v438
        %v457 = vpop.f32.mrf.mxu0
        %v458 = vadd.f32 %v435, %v457
        %459 = vdwg.mxu0
        %vm460 = vcmask 64512
        %v462 = vsel %vm460, %v377, 0
        %v465 = vsel %vm460, %v420, 0
        %467 = vmatpush.xpose.msra.mxu0 0.0
        %468 = vmatpush.xpose.msra.mxu0 0.0
        %469 = vmatpush.xpose.msra.mxu0 0.0
        %470 = vmatpush.xpose.msra.mxu0 0.0
        %471 = vmatpush.xpose.msra.mxu0 0.0
        %472 = vmatpush.xpose.msra.mxu0 0.0
        %473 = vmatpush.xpose.msra.mxu0 0.0
        %474 = vmatpush.xpose.msra.mxu0 0.0
        %475 = vmatpush.xpose.msra.mxu0 0.0
        %476 = vmatpush.xpose.msra.mxu0 0.0
        %477 = vmatpush.xpose.msra.mxu0 0.0
        %478 = vmatpush.xpose.msra.mxu0 0.0
        %479 = vmatpush.xpose.msra.mxu0 0.0
        %480 = vmatpush.xpose.msra.mxu0 0.0
        %481 = vmatpush.xpose.msra.mxu0 0.0
        %482 = vmatpush.xpose.msra.mxu0 %v465
        %483 = vmatmul.f32.gmra.mxu0 %v462
        %v484 = vpop.f32.mrf.mxu0
        %v485 = vadd.f32 0.0, %v484
        %486 = vdwg.mxu0
        %v487 = vmul.f32 %v485, 0.35355338
        %v488 = vsel %vm460, %v487, -inf
        %489 = vmax.xlane.f32.xlu0 %v488
        %v490 = vpop.xlane.xlu0 %489
        %v491 = vsub.f32 %v487, %v490
        %v492 = vmul.f32 %v491, 1.442695
        %v493 = vpow.pop %v492
        %v494 = vsel %vm460, %v493, 0.0
        %495 = vadd.xlane.f32.xlu0 %v494
        %v496 = vpop.xlane.xlu0 %495
        %v497 = vrcp.pop %v496
        %v498 = vmul.f32 %v493, %v497
        %v499 = vadd.f32 %v498, 0.0
        %v501 = vsel %vm460, %v498, 0
        %503 = vmatpush.msra.mxu0 0.0
        %504 = vmatpush.msra.mxu0 0.0
        %505 = vmatpush.msra.mxu0 0.0
        %506 = vmatpush.msra.mxu0 0.0
        %507 = vmatpush.msra.mxu0 0.0
        %508 = vmatpush.msra.mxu0 0.0
        %509 = vmatpush.msra.mxu0 0.0
        %510 = vmatpush.msra.mxu0 0.0
        %511 = vmatpush.msra.mxu0 0.0
        %512 = vmatpush.msra.mxu0 0.0
        %513 = vmatpush.msra.mxu0 0.0
        %514 = vmatpush.msra.mxu0 0.0
        %515 = vmatpush.msra.mxu0 0.0
        %516 = vmatpush.msra.mxu0 0.0
        %517 = vmatpush.msra.mxu0 0.0
        %518 = vmatpush.msra.mxu0 %v458
        %519 = vmatmul.f32.gmra.mxu0 %v501
        %v520 = vpop.f32.mrf.mxu0
        %v521 = vadd.f32 0.0, %v520
        %522 = vdwg.mxu0
        %523 = vrot.lane.b32.xlu0 %v377, 120
        %v524 = vpop.permute.xlu0 %523
        %525 = vrot.lane.b32.xlu0 %v420, 120
        %v526 = vpop.permute.xlu0 %525
        %v527 = vsel %vm460, %v524, 0
        %v529 = vsel %vm460, %v526, 0
        %531 = vmatpush.xpose.msra.mxu0 0.0
        %532 = vmatpush.xpose.msra.mxu0 0.0
        %533 = vmatpush.xpose.msra.mxu0 0.0
        %534 = vmatpush.xpose.msra.mxu0 0.0
        %535 = vmatpush.xpose.msra.mxu0 0.0
        %536 = vmatpush.xpose.msra.mxu0 0.0
        %537 = vmatpush.xpose.msra.mxu0 0.0
        %538 = vmatpush.xpose.msra.mxu0 0.0
        %539 = vmatpush.xpose.msra.mxu0 0.0
        %540 = vmatpush.xpose.msra.mxu0 0.0
        %541 = vmatpush.xpose.msra.mxu0 0.0
        %542 = vmatpush.xpose.msra.mxu0 0.0
        %543 = vmatpush.xpose.msra.mxu0 0.0
        %544 = vmatpush.xpose.msra.mxu0 0.0
        %545 = vmatpush.xpose.msra.mxu0 0.0
        %546 = vmatpush.xpose.msra.mxu0 %v529
        %547 = vmatmul.f32.gmra.mxu0 %v527
        %v548 = vpop.f32.mrf.mxu0
        %v549 = vadd.f32 0.0, %v548
        %550 = vdwg.mxu0
        %v551 = vmul.f32 %v549, 0.35355338
        %v552 = vsel %vm460, %v551, -inf
        %553 = vmax.xlane.f32.xlu0 %v552
        %v554 = vpop.xlane.xlu0 %553
        %v555 = vsub.f32 %v551, %v554
        %v556 = vmul.f32 %v555, 1.442695
        %v557 = vpow.pop %v556
        %v558 = vsel %vm460, %v557, 0.0
        %559 = vadd.xlane.f32.xlu0 %v558
        %v560 = vpop.xlane.xlu0 %559
        %v561 = vrcp.pop %v560
        %v562 = vmul.f32 %v557, %v561
        %v563 = vadd.f32 %v499, %v562
        %565 = vrot.lane.b32.xlu0 %v458, 120
        %v566 = vpop.permute.xlu0 %565
        %v569 = vsel %vm460, %v562, 0
        %571 = vmatpush.msra.mxu0 0.0
        %572 = vmatpush.msra.mxu0 0.0
        %573 = vmatpush.msra.mxu0 0.0
        %574 = vmatpush.msra.mxu0 0.0
        %575 = vmatpush.msra.mxu0 0.0
        %576 = vmatpush.msra.mxu0 0.0
        %577 = vmatpush.msra.mxu0 0.0
        %578 = vmatpush.msra.mxu0 0.0
        %579 = vmatpush.msra.mxu0 0.0
        %580 = vmatpush.msra.mxu0 0.0
        %581 = vmatpush.msra.mxu0 0.0
        %582 = vmatpush.msra.mxu0 0.0
        %583 = vmatpush.msra.mxu0 0.0
        %584 = vmatpush.msra.mxu0 0.0
        %585 = vmatpush.msra.mxu0 0.0
        %586 = vmatpush.msra.mxu0 %v566
        %587 = vmatmul.f32.gmra.mxu0 %v569
        %v588 = vpop.f32.mrf.mxu0
        %v589 = vadd.f32 0.0, %v588
        %590 = vdwg.mxu0
        %591 = vrot.lane.b32.xlu0 %v350, 32
        %v592 = vpop.permute.xlu0 %591
        %v595 = vsel %vm460, %v589, 0
        %597 = vmatpush.msra.mxu0 0.0
        %598 = vmatpush.msra.mxu0 0.0
        %599 = vmatpush.msra.mxu0 0.0
        %600 = vmatpush.msra.mxu0 0.0
        %601 = vmatpush.msra.mxu0 0.0
        %602 = vmatpush.msra.mxu0 0.0
        %603 = vmatpush.msra.mxu0 0.0
        %604 = vmatpush.msra.mxu0 0.0
        %605 = vmatpush.msra.mxu0 0.0
        %606 = vmatpush.msra.mxu0 0.0
        %607 = vmatpush.msra.mxu0 0.0
        %608 = vmatpush.msra.mxu0 0.0
        %609 = vmatpush.msra.mxu0 0.0
        %610 = vmatpush.msra.mxu0 0.0
        %611 = vmatpush.msra.mxu0 0.0
        %612 = vmatpush.msra.mxu0 %v592
        %613 = vmatmul.f32.gmra.mxu0 %v595
        %v614 = vpop.f32.mrf.mxu0
        %v615 = vadd.f32 0.0, %v614
        %616 = vdwg.mxu0
        %617 = vrot.lane.b32.xlu0 %v349, 32
        %v618 = vpop.permute.xlu0 %617
        %v621 = vsel %vm460, %v521, 0
        %623 = vmatpush.msra.mxu0 0.0
        %624 = vmatpush.msra.mxu0 0.0
        %625 = vmatpush.msra.mxu0 0.0
        %626 = vmatpush.msra.mxu0 0.0
        %627 = vmatpush.msra.mxu0 0.0
        %628 = vmatpush.msra.mxu0 0.0
        %629 = vmatpush.msra.mxu0 0.0
        %630 = vmatpush.msra.mxu0 0.0
        %631 = vmatpush.msra.mxu0 0.0
        %632 = vmatpush.msra.mxu0 0.0
        %633 = vmatpush.msra.mxu0 0.0
        %634 = vmatpush.msra.mxu0 0.0
        %635 = vmatpush.msra.mxu0 0.0
        %636 = vmatpush.msra.mxu0 0.0
        %637 = vmatpush.msra.mxu0 0.0
        %638 = vmatpush.msra.mxu0 %v618
        %639 = vmatmul.f32.gmra.mxu0 %v621
        %v640 = vpop.f32.mrf.mxu0
        %v641 = vadd.f32 %v615, %v640
        %642 = vdwg.mxu0
        %643 = vrot.lane.b32.xlu0 %v377, 112
        %v644 = vpop.permute.xlu0 %643
        %645 = vrot.lane.b32.xlu0 %v420, 112
        %v646 = vpop.permute.xlu0 %645
        %v647 = vsel %vm460, %v644, 0
        %v649 = vsel %vm460, %v646, 0
        %651 = vmatpush.xpose.msra.mxu0 0.0
        %652 = vmatpush.xpose.msra.mxu0 0.0
        %653 = vmatpush.xpose.msra.mxu0 0.0
        %654 = vmatpush.xpose.msra.mxu0 0.0
        %655 = vmatpush.xpose.msra.mxu0 0.0
        %656 = vmatpush.xpose.msra.mxu0 0.0
        %657 = vmatpush.xpose.msra.mxu0 0.0
        %658 = vmatpush.xpose.msra.mxu0 0.0
        %659 = vmatpush.xpose.msra.mxu0 0.0
        %660 = vmatpush.xpose.msra.mxu0 0.0
        %661 = vmatpush.xpose.msra.mxu0 0.0
        %662 = vmatpush.xpose.msra.mxu0 0.0
        %663 = vmatpush.xpose.msra.mxu0 0.0
        %664 = vmatpush.xpose.msra.mxu0 0.0
        %665 = vmatpush.xpose.msra.mxu0 0.0
        %666 = vmatpush.xpose.msra.mxu0 %v649
        %667 = vmatmul.f32.gmra.mxu0 %v647
        %v668 = vpop.f32.mrf.mxu0
        %v669 = vadd.f32 0.0, %v668
        %670 = vdwg.mxu0
        %v671 = vmul.f32 %v669, 0.35355338
        %v672 = vsel %vm460, %v671, -inf
        %673 = vmax.xlane.f32.xlu0 %v672
        %v674 = vpop.xlane.xlu0 %673
        %v675 = vsub.f32 %v671, %v674
        %v676 = vmul.f32 %v675, 1.442695
        %v677 = vpow.pop %v676
        %v678 = vsel %vm460, %v677, 0.0
        %679 = vadd.xlane.f32.xlu0 %v678
        %v680 = vpop.xlane.xlu0 %679
        %v681 = vrcp.pop %v680
        %v682 = vmul.f32 %v677, %v681
        %v683 = vadd.f32 %v563, %v682
        %684 = vrot.lane.b32.xlu0 %v458, 112
        %v685 = vpop.permute.xlu0 %684
        %v688 = vsel %vm460, %v682, 0
        %690 = vmatpush.msra.mxu0 0.0
        %691 = vmatpush.msra.mxu0 0.0
        %692 = vmatpush.msra.mxu0 0.0
        %693 = vmatpush.msra.mxu0 0.0
        %694 = vmatpush.msra.mxu0 0.0
        %695 = vmatpush.msra.mxu0 0.0
        %696 = vmatpush.msra.mxu0 0.0
        %697 = vmatpush.msra.mxu0 0.0
        %698 = vmatpush.msra.mxu0 0.0
        %699 = vmatpush.msra.mxu0 0.0
        %700 = vmatpush.msra.mxu0 0.0
        %701 = vmatpush.msra.mxu0 0.0
        %702 = vmatpush.msra.mxu0 0.0
        %703 = vmatpush.msra.mxu0 0.0
        %704 = vmatpush.msra.mxu0 0.0
        %705 = vmatpush.msra.mxu0 %v685
        %706 = vmatmul.f32.gmra.mxu0 %v688
        %v707 = vpop.f32.mrf.mxu0
        %v708 = vadd.f32 0.0, %v707
        %709 = vdwg.mxu0
        %710 = vrot.lane.b32.xlu0 %v351, 32
        %v711 = vpop.permute.xlu0 %710
        %v714 = vsel %vm460, %v708, 0
        %716 = vmatpush.msra.mxu0 0.0
        %717 = vmatpush.msra.mxu0 0.0
        %718 = vmatpush.msra.mxu0 0.0
        %719 = vmatpush.msra.mxu0 0.0
        %720 = vmatpush.msra.mxu0 0.0
        %721 = vmatpush.msra.mxu0 0.0
        %722 = vmatpush.msra.mxu0 0.0
        %723 = vmatpush.msra.mxu0 0.0
        %724 = vmatpush.msra.mxu0 0.0
        %725 = vmatpush.msra.mxu0 0.0
        %726 = vmatpush.msra.mxu0 0.0
        %727 = vmatpush.msra.mxu0 0.0
        %728 = vmatpush.msra.mxu0 0.0
        %729 = vmatpush.msra.mxu0 0.0
        %730 = vmatpush.msra.mxu0 0.0
        %731 = vmatpush.msra.mxu0 %v711
        %732 = vmatmul.f32.gmra.mxu0 %v714
        %v733 = vpop.f32.mrf.mxu0
        %v734 = vadd.f32 0.0, %v733
        %735 = vdwg.mxu0
        %v736 = vadd.f32 %v641, %v734
        %737 = vrot.lane.b32.xlu0 %v377, 104
        %v738 = vpop.permute.xlu0 %737
        %739 = vrot.lane.b32.xlu0 %v420, 104
        %v740 = vpop.permute.xlu0 %739
        %v741 = vsel %vm460, %v738, 0
        %v743 = vsel %vm460, %v740, 0
        %745 = vmatpush.xpose.msra.mxu0 0.0
        %746 = vmatpush.xpose.msra.mxu0 0.0
        %747 = vmatpush.xpose.msra.mxu0 0.0
        %748 = vmatpush.xpose.msra.mxu0 0.0
        %749 = vmatpush.xpose.msra.mxu0 0.0
        %750 = vmatpush.xpose.msra.mxu0 0.0
        %751 = vmatpush.xpose.msra.mxu0 0.0
        %752 = vmatpush.xpose.msra.mxu0 0.0
        %753 = vmatpush.xpose.msra.mxu0 0.0
        %754 = vmatpush.xpose.msra.mxu0 0.0
        %755 = vmatpush.xpose.msra.mxu0 0.0
        %756 = vmatpush.xpose.msra.mxu0 0.0
        %757 = vmatpush.xpose.msra.mxu0 0.0
        %758 = vmatpush.xpose.msra.mxu0 0.0
        %759 = vmatpush.xpose.msra.mxu0 0.0
        %760 = vmatpush.xpose.msra.mxu0 %v743
        %761 = vmatmul.f32.gmra.mxu0 %v741
        %v762 = vpop.f32.mrf.mxu0
        %v763 = vadd.f32 0.0, %v762
        %764 = vdwg.mxu0
        %v765 = vmul.f32 %v763, 0.35355338
        %v766 = vsel %vm460, %v765, -inf
        %767 = vmax.xlane.f32.xlu0 %v766
        %v768 = vpop.xlane.xlu0 %767
        %v769 = vsub.f32 %v765, %v768
        %v770 = vmul.f32 %v769, 1.442695
        %v771 = vpow.pop %v770
        %v772 = vsel %vm460, %v771, 0.0
        %773 = vadd.xlane.f32.xlu0 %v772
        %v774 = vpop.xlane.xlu0 %773
        %v775 = vrcp.pop %v774
        %v776 = vmul.f32 %v771, %v775
        %v777 = vadd.f32 %v683, %v776
        %778 = vrot.lane.b32.xlu0 %v458, 104
        %v779 = vpop.permute.xlu0 %778
        %v782 = vsel %vm460, %v776, 0
        %784 = vmatpush.msra.mxu0 0.0
        %785 = vmatpush.msra.mxu0 0.0
        %786 = vmatpush.msra.mxu0 0.0
        %787 = vmatpush.msra.mxu0 0.0
        %788 = vmatpush.msra.mxu0 0.0
        %789 = vmatpush.msra.mxu0 0.0
        %790 = vmatpush.msra.mxu0 0.0
        %791 = vmatpush.msra.mxu0 0.0
        %792 = vmatpush.msra.mxu0 0.0
        %793 = vmatpush.msra.mxu0 0.0
        %794 = vmatpush.msra.mxu0 0.0
        %795 = vmatpush.msra.mxu0 0.0
        %796 = vmatpush.msra.mxu0 0.0
        %797 = vmatpush.msra.mxu0 0.0
        %798 = vmatpush.msra.mxu0 0.0
        %799 = vmatpush.msra.mxu0 %v779
        %800 = vmatmul.f32.gmra.mxu0 %v782
        %v801 = vpop.f32.mrf.mxu0
        %v802 = vadd.f32 0.0, %v801
        %803 = vdwg.mxu0
        %804 = vrot.lane.b32.xlu0 %v352, 32
        %v805 = vpop.permute.xlu0 %804
        %v808 = vsel %vm460, %v802, 0
        %810 = vmatpush.msra.mxu0 0.0
        %811 = vmatpush.msra.mxu0 0.0
        %812 = vmatpush.msra.mxu0 0.0
        %813 = vmatpush.msra.mxu0 0.0
        %814 = vmatpush.msra.mxu0 0.0
        %815 = vmatpush.msra.mxu0 0.0
        %816 = vmatpush.msra.mxu0 0.0
        %817 = vmatpush.msra.mxu0 0.0
        %818 = vmatpush.msra.mxu0 0.0
        %819 = vmatpush.msra.mxu0 0.0
        %820 = vmatpush.msra.mxu0 0.0
        %821 = vmatpush.msra.mxu0 0.0
        %822 = vmatpush.msra.mxu0 0.0
        %823 = vmatpush.msra.mxu0 0.0
        %824 = vmatpush.msra.mxu0 0.0
        %825 = vmatpush.msra.mxu0 %v805
        %826 = vmatmul.f32.gmra.mxu0 %v808
        %v827 = vpop.f32.mrf.mxu0
        %v828 = vadd.f32 0.0, %v827
        %829 = vdwg.mxu0
        %v830 = vadd.f32 %v736, %v828
        %831 = vrot.lane.b32.xlu0 %v354, 32
        %v832 = vpop.permute.xlu0 %831
        %v834 = vadd.f32 %v830, %v832
        %v835 = vmul.f32 %v777, 0.25
        %836 = vst.msk [vmem:[%s333] sm:$0xff] %vm460, %v835
        %v837 = vadd.f32 %v346, %v834
        %v838 = vsel %vm355, %v837, 0.0
        %839 = vadd.xlane.f32.xlu0 %v838
        %v840 = vpop.xlane.xlu0 %839
        %v841 = vrcp.pop 32.0
        %v842 = vmul.f32 32.0, %v841
        %v843 = vsub.f32 1.0, %v842
        %v844 = vmul.f32 %v841, %v843
        %v845 = vadd.f32 %v841, %v844
        %vm846 = vweird.f32 %v841
        %v847 = vsel %vm846, %v841, %v845
        %v848 = vmul.f32 %v840, %v847
        %v849 = vsub.f32 %v837, %v848
        %v850 = vmul.f32 %v849, %v849
        %v851 = vsel %vm355, %v850, 0.0
        %852 = vadd.xlane.f32.xlu0 %v851
        %v853 = vpop.xlane.xlu0 %852
        %v854 = vmul.f32 %v853, %v847
        %v855 = vadd.f32 %v854, 1e-05
        %v856 = vrsqrt.pop %v855
        %v857 = vmul.f32 %v856, %v855
        %v858 = vmul.f32 %v857, %v856
        %v859 = vmul.f32 0.5, %v858
        %v860 = vsub.f32 1.5, %v859
        %v861 = vmul.f32 %v856, %v860
        %vm862 = vweird.f32 %v855
        %vm863 = vweird.f32 %v856
        %vm864 = vmor %vm862, %vm863
        %v865 = vsel %vm864, %v856, %v861
        %v866 = vmul.f32 %v849, %v865
        %v867 = vperm.slane %v353, 1
        %v868 = vmul.f32 %v866, %v867
        %870 = vrot.lane.b32.xlu0 %v867, 96
        %v871 = vpop.permute.xlu0 %870
        %v873 = vadd.f32 %v868, %v871
        %v874 = vld [vmem:[%s5] sm:$0xff]
        %v875 = vld [vmem:[%s5 + $0x8] sm:$0xff]
        %v876 = vld [vmem:[%s5 + $0x10] sm:$0xff]
        %v877 = vld [vmem:[%s5 + $0x18] sm:$0xff]
        %v878 = vperm.slane %v353, 2
        %v880 = vsel %vm355, %v873, 0
        %882 = vmatpush.msra.mxu0 0.0
        %883 = vmatpush.msra.mxu0 0.0
        %884 = vmatpush.msra.mxu0 0.0
        %885 = vmatpush.msra.mxu0 0.0
        %886 = vmatpush.msra.mxu0 0.0
        %887 = vmatpush.msra.mxu0 0.0
        %888 = vmatpush.msra.mxu0 0.0
        %889 = vmatpush.msra.mxu0 0.0
        %890 = vmatpush.msra.mxu0 0.0
        %891 = vmatpush.msra.mxu0 0.0
        %892 = vmatpush.msra.mxu0 0.0
        %893 = vmatpush.msra.mxu0 0.0
        %894 = vmatpush.msra.mxu0 %v877
        %895 = vmatpush.msra.mxu0 %v876
        %896 = vmatpush.msra.mxu0 %v875
        %897 = vmatpush.msra.mxu0 %v874
        %898 = vmatmul.f32.gmra.mxu0 %v880
        %v899 = vpop.f32.mrf.mxu0
        %v900 = vadd.f32 %v878, %v899
        %901 = vdwg.mxu0
        %v902 = vmax.f32 %v900, 0.0
        %v903 = vld [vmem:[%s6] sm:$0xff]
        %v904 = vld [vmem:[%s6 + $0x8] sm:$0xff]
        %v905 = vld [vmem:[%s6 + $0x10] sm:$0xff]
        %v906 = vld [vmem:[%s6 + $0x18] sm:$0xff]
        %v907 = vld [vmem:[%s6 + $0x20] sm:$0xff]
        %v908 = vld [vmem:[%s6 + $0x28] sm:$0xff]
        %v909 = vld [vmem:[%s6 + $0x30] sm:$0xff]
        %v910 = vld [vmem:[%s6 + $0x38] sm:$0xff]
        %912 = vrot.lane.b32.xlu0 %v878, 64
        %v913 = vpop.permute.xlu0 %912
        %vm915 = vcmask 523264
        %v917 = vsel %vm915, %v902, 0
        %919 = vmatpush.msra.mxu0 0.0
        %920 = vmatpush.msra.mxu0 0.0
        %921 = vmatpush.msra.mxu0 0.0
        %922 = vmatpush.msra.mxu0 0.0
        %923 = vmatpush.msra.mxu0 0.0
        %924 = vmatpush.msra.mxu0 0.0
        %925 = vmatpush.msra.mxu0 0.0
        %926 = vmatpush.msra.mxu0 0.0
        %927 = vmatpush.msra.mxu0 %v910
        %928 = vmatpush.msra.mxu0 %v909
        %929 = vmatpush.msra.mxu0 %v908
        %930 = vmatpush.msra.mxu0 %v907
        %931 = vmatpush.msra.mxu0 %v906
        %932 = vmatpush.msra.mxu0 %v905
        %933 = vmatpush.msra.mxu0 %v904
        %934 = vmatpush.msra.mxu0 %v903
        %935 = vmatmul.f32.gmra.mxu0 %v917
        %v936 = vpop.f32.mrf.mxu0
        %v937 = vadd.f32 %v913, %v936
        %938 = vdwg.mxu0
        %v939 = vadd.f32 %v873, %v937
        %v940 = vsel %vm355, %v939, 0.0
        %941 = vadd.xlane.f32.xlu0 %v940
        %v942 = vpop.xlane.xlu0 %941
        %v943 = vmul.f32 %v942, %v847
        %v944 = vsub.f32 %v939, %v943
        %v945 = vmul.f32 %v944, %v944
        %v946 = vsel %vm355, %v945, 0.0
        %947 = vadd.xlane.f32.xlu0 %v946
        %v948 = vpop.xlane.xlu0 %947
        %v949 = vmul.f32 %v948, %v847
        %v950 = vadd.f32 %v949, 1e-05
        %v951 = vrsqrt.pop %v950
        %v952 = vmul.f32 %v951, %v950
        %v953 = vmul.f32 %v952, %v951
        %v954 = vmul.f32 0.5, %v953
        %v955 = vsub.f32 1.5, %v954
        %v956 = vmul.f32 %v951, %v955
        %vm957 = vweird.f32 %v950
        %vm958 = vweird.f32 %v951
        %vm959 = vmor %vm957, %vm958
        %v960 = vsel %vm959, %v951, %v956
        %v961 = vmul.f32 %v944, %v960
        %962 = vrot.lane.b32.xlu0 %v867, 64
        %v963 = vpop.permute.xlu0 %962
        %v965 = vmul.f32 %v961, %v963
        %966 = vrot.lane.b32.xlu0 %v867, 32
        %v967 = vpop.permute.xlu0 %966
        %v969 = vadd.f32 %v965, %v967
        %s970 = scalar_lea.vmem %s3, 32
        %v971 = vld [vmem:[%s970] sm:$0xff]
        %v972 = vld [vmem:[%s970 + $0x8] sm:$0xff]
        %v973 = vld [vmem:[%s970 + $0x10] sm:$0xff]
        %v974 = vld [vmem:[%s970 + $0x18] sm:$0xff]
        %s975 = scalar_lea.vmem %s4, 8
        %v976 = vld [vmem:[%s975] sm:$0xff]
        %v977 = vperm.slane %v976, 0
        %v979 = vsel %vm355, %v969, 0
        %981 = vmatpush.msra.mxu0 0.0
        %982 = vmatpush.msra.mxu0 0.0
        %983 = vmatpush.msra.mxu0 0.0
        %984 = vmatpush.msra.mxu0 0.0
        %985 = vmatpush.msra.mxu0 0.0
        %986 = vmatpush.msra.mxu0 0.0
        %987 = vmatpush.msra.mxu0 0.0
        %988 = vmatpush.msra.mxu0 0.0
        %989 = vmatpush.msra.mxu0 0.0
        %990 = vmatpush.msra.mxu0 0.0
        %991 = vmatpush.msra.mxu0 0.0
        %992 = vmatpush.msra.mxu0 0.0
        %993 = vmatpush.msra.mxu0 %v974
        %994 = vmatpush.msra.mxu0 %v973
        %995 = vmatpush.msra.mxu0 %v972
        %996 = vmatpush.msra.mxu0 %v971
        %997 = vmatmul.f32.gmra.mxu0 %v979
        %v998 = vpop.f32.mrf.mxu0
        %v999 = vadd.f32 %v977, %v998
        %1000 = vdwg.mxu0
        %1005 = vrot.lane.b32.xlu0 %v971, 96
        %v1006 = vpop.permute.xlu0 %1005
        %1007 = vrot.lane.b32.xlu0 %v972, 96
        %v1008 = vpop.permute.xlu0 %1007
        %1009 = vrot.lane.b32.xlu0 %v973, 96
        %v1010 = vpop.permute.xlu0 %1009
        %1011 = vrot.lane.b32.xlu0 %v974, 96
        %v1012 = vpop.permute.xlu0 %1011
        %1018 = vrot.lane.b32.xlu0 %v977, 96
        %v1019 = vpop.permute.xlu0 %1018
        %1021 = vmatpush.msra.mxu0 0.0
        %1022 = vmatpush.msra.mxu0 0.0
        %1023 = vmatpush.msra.mxu0 0.0
        %1024 = vmatpush.msra.mxu0 0.0
        %1025 = vmatpush.msra.mxu0 0.0
        %1026 = vmatpush.msra.mxu0 0.0
        %1027 = vmatpush.msra.mxu0 0.0
        %1028 = vmatpush.msra.mxu0 0.0
        %1029 = vmatpush.msra.mxu0 0.0
        %1030 = vmatpush.msra.mxu0 0.0
        %1031 = vmatpush.msra.mxu0 0.0
        %1032 = vmatpush.msra.mxu0 0.0
        %1033 = vmatpush.msra.mxu0 %v1012
        %1034 = vmatpush.msra.mxu0 %v1010
        %1035 = vmatpush.msra.mxu0 %v1008
        %1036 = vmatpush.msra.mxu0 %v1006
        %1037 = vmatmul.f32.gmra.mxu0 %v400
        %v1038 = vpop.f32.mrf.mxu0
        %v1039 = vadd.f32 %v1019, %v1038
        %1040 = vdwg.mxu0
        %1041 = vrot.lane.b32.xlu0 %v971, 64
        %v1042 = vpop.permute.xlu0 %1041
        %1043 = vrot.lane.b32.xlu0 %v972, 64
        %v1044 = vpop.permute.xlu0 %1043
        %1045 = vrot.lane.b32.xlu0 %v973, 64
        %v1046 = vpop.permute.xlu0 %1045
        %1047 = vrot.lane.b32.xlu0 %v974, 64
        %v1048 = vpop.permute.xlu0 %1047
        %1053 = vrot.lane.b32.xlu0 %v977, 64
        %v1054 = vpop.permute.xlu0 %1053
        %1056 = vmatpush.msra.mxu0 0.0
        %1057 = vmatpush.msra.mxu0 0.0
        %1058 = vmatpush.msra.mxu0 0.0
        %1059 = vmatpush.msra.mxu0 0.0
        %1060 = vmatpush.msra.mxu0 0.0
        %1061 = vmatpush.msra.mxu0 0.0
        %1062 = vmatpush.msra.mxu0 0.0
        %1063 = vmatpush.msra.mxu0 0.0
        %1064 = vmatpush.msra.mxu0 0.0
        %1065 = vmatpush.msra.mxu0 0.0
        %1066 = vmatpush.msra.mxu0 0.0
        %1067 = vmatpush.msra.mxu0 0.0
        %1068 = vmatpush.msra.mxu0 %v1048
        %1069 = vmatpush.msra.mxu0 %v1046
        %1070 = vmatpush.msra.mxu0 %v1044
        %1071 = vmatpush.msra.mxu0 %v1042
        %1072 = vmatmul.f32.gmra.mxu0 %v438
        %v1073 = vpop.f32.mrf.mxu0
        %v1074 = vadd.f32 %v1054, %v1073
        %1075 = vdwg.mxu0
        %v1077 = vsel %vm460, %v999, 0
        %v1080 = vsel %vm460, %v1039, 0
        %1082 = vmatpush.xpose.msra.mxu0 0.0
        %1083 = vmatpush.xpose.msra.mxu0 0.0
        %1084 = vmatpush.xpose.msra.mxu0 0.0
        %1085 = vmatpush.xpose.msra.mxu0 0.0
        %1086 = vmatpush.xpose.msra.mxu0 0.0
        %1087 = vmatpush.xpose.msra.mxu0 0.0
        %1088 = vmatpush.xpose.msra.mxu0 0.0
        %1089 = vmatpush.xpose.msra.mxu0 0.0
        %1090 = vmatpush.xpose.msra.mxu0 0.0
        %1091 = vmatpush.xpose.msra.mxu0 0.0
        %1092 = vmatpush.xpose.msra.mxu0 0.0
        %1093 = vmatpush.xpose.msra.mxu0 0.0
        %1094 = vmatpush.xpose.msra.mxu0 0.0
        %1095 = vmatpush.xpose.msra.mxu0 0.0
        %1096 = vmatpush.xpose.msra.mxu0 0.0
        %1097 = vmatpush.xpose.msra.mxu0 %v1080
        %1098 = vmatmul.f32.gmra.mxu0 %v1077
        %v1099 = vpop.f32.mrf.mxu0
        %v1100 = vadd.f32 0.0, %v1099
        %1101 = vdwg.mxu0
        %v1102 = vmul.f32 %v1100, 0.35355338
        %v1103 = vsel %vm460, %v1102, -inf
        %1104 = vmax.xlane.f32.xlu0 %v1103
        %v1105 = vpop.xlane.xlu0 %1104
        %v1106 = vsub.f32 %v1102, %v1105
        %v1107 = vmul.f32 %v1106, 1.442695
        %v1108 = vpow.pop %v1107
        %v1109 = vsel %vm460, %v1108, 0.0
        %1110 = vadd.xlane.f32.xlu0 %v1109
        %v1111 = vpop.xlane.xlu0 %1110
        %v1112 = vrcp.pop %v1111
        %v1113 = vmul.f32 %v1108, %v1112
        %v1114 = vadd.f32 %v1113, 0.0
        %v1116 = vsel %vm460, %v1113, 0
        %1118 = vmatpush.msra.mxu0 0.0
        %1119 = vmatpush.msra.mxu0 0.0
        %1120 = vmatpush.msra.mxu0 0.0
        %1121 = vmatpush.msra.mxu0 0.0
        %1122 = vmatpush.msra.mxu0 0.0
        %1123 = vmatpush.msra.mxu0 0.0
        %1124 = vmatpush.msra.mxu0 0.0
        %1125 = vmatpush.msra.mxu0 0.0
        %1126 = vmatpush.msra.mxu0 0.0
        %1127 = vmatpush.msra.mxu0 0.0
        %1128 = vmatpush.msra.mxu0 0.0
        %1129 = vmatpush.msra.mxu0 0.0
        %1130 = vmatpush.msra.mxu0 0.0
        %1131 = vmatpush.msra.mxu0 0.0
        %1132 = vmatpush.msra.mxu0 0.0
        %1133 = vmatpush.msra.mxu0 %v1074
        %1134 = vmatmul.f32.gmra.mxu0 %v1116
        %v1135 = vpop.f32.mrf.mxu0
        %v1136 = vadd.f32 0.0, %v1135
        %1137 = vdwg.mxu0
        %1138 = vrot.lane.b32.xlu0 %v999, 120
        %v1139 = vpop.permute.xlu0 %1138
        %1140 = vrot.lane.b32.xlu0 %v1039, 120
        %v1141 = vpop.permute.xlu0 %1140
        %v1142 = vsel %vm460, %v1139, 0
        %v1144 = vsel %vm460, %v1141, 0
        %1146 = vmatpush.xpose.msra.mxu0 0.0
        %1147 = vmatpush.xpose.msra.mxu0 0.0
        %1148 = vmatpush.xpose.msra.mxu0 0.0
        %1149 = vmatpush.xpose.msra.mxu0 0.0
        %1150 = vmatpush.xpose.msra.mxu0 0.0
        %1151 = vmatpush.xpose.msra.mxu0 0.0
        %1152 = vmatpush.xpose.msra.mxu0 0.0
        %1153 = vmatpush.xpose.msra.mxu0 0.0
        %1154 = vmatpush.xpose.msra.mxu0 0.0
        %1155 = vmatpush.xpose.msra.mxu0 0.0
        %1156 = vmatpush.xpose.msra.mxu0 0.0
        %1157 = vmatpush.xpose.msra.mxu0 0.0
        %1158 = vmatpush.xpose.msra.mxu0 0.0
        %1159 = vmatpush.xpose.msra.mxu0 0.0
        %1160 = vmatpush.xpose.msra.mxu0 0.0
        %1161 = vmatpush.xpose.msra.mxu0 %v1144
        %1162 = vmatmul.f32.gmra.mxu0 %v1142
        %v1163 = vpop.f32.mrf.mxu0
        %v1164 = vadd.f32 0.0, %v1163
        %1165 = vdwg.mxu0
        %v1166 = vmul.f32 %v1164, 0.35355338
        %v1167 = vsel %vm460, %v1166, -inf
        %1168 = vmax.xlane.f32.xlu0 %v1167
        %v1169 = vpop.xlane.xlu0 %1168
        %v1170 = vsub.f32 %v1166, %v1169
        %v1171 = vmul.f32 %v1170, 1.442695
        %v1172 = vpow.pop %v1171
        %v1173 = vsel %vm460, %v1172, 0.0
        %1174 = vadd.xlane.f32.xlu0 %v1173
        %v1175 = vpop.xlane.xlu0 %1174
        %v1176 = vrcp.pop %v1175
        %v1177 = vmul.f32 %v1172, %v1176
        %v1178 = vadd.f32 %v1114, %v1177
        %1180 = vrot.lane.b32.xlu0 %v1074, 120
        %v1181 = vpop.permute.xlu0 %1180
        %v1184 = vsel %vm460, %v1177, 0
        %1186 = vmatpush.msra.mxu0 0.0
        %1187 = vmatpush.msra.mxu0 0.0
        %1188 = vmatpush.msra.mxu0 0.0
        %1189 = vmatpush.msra.mxu0 0.0
        %1190 = vmatpush.msra.mxu0 0.0
        %1191 = vmatpush.msra.mxu0 0.0
        %1192 = vmatpush.msra.mxu0 0.0
        %1193 = vmatpush.msra.mxu0 0.0
        %1194 = vmatpush.msra.mxu0 0.0
        %1195 = vmatpush.msra.mxu0 0.0
        %1196 = vmatpush.msra.mxu0 0.0
        %1197 = vmatpush.msra.mxu0 0.0
        %1198 = vmatpush.msra.mxu0 0.0
        %1199 = vmatpush.msra.mxu0 0.0
        %1200 = vmatpush.msra.mxu0 0.0
        %1201 = vmatpush.msra.mxu0 %v1181
        %1202 = vmatmul.f32.gmra.mxu0 %v1184
        %v1203 = vpop.f32.mrf.mxu0
        %v1204 = vadd.f32 0.0, %v1203
        %1205 = vdwg.mxu0
        %1206 = vrot.lane.b32.xlu0 %v972, 32
        %v1207 = vpop.permute.xlu0 %1206
        %v1210 = vsel %vm460, %v1204, 0
        %1212 = vmatpush.msra.mxu0 0.0
        %1213 = vmatpush.msra.mxu0 0.0
        %1214 = vmatpush.msra.mxu0 0.0
        %1215 = vmatpush.msra.mxu0 0.0
        %1216 = vmatpush.msra.mxu0 0.0
        %1217 = vmatpush.msra.mxu0 0.0
        %1218 = vmatpush.msra.mxu0 0.0
        %1219 = vmatpush.msra.mxu0 0.0
        %1220 = vmatpush.msra.mxu0 0.0
        %1221 = vmatpush.msra.mxu0 0.0
        %1222 = vmatpush.msra.mxu0 0.0
        %1223 = vmatpush.msra.mxu0 0.0
        %1224 = vmatpush.msra.mxu0 0.0
        %1225 = vmatpush.msra.mxu0 0.0
        %1226 = vmatpush.msra.mxu0 0.0
        %1227 = vmatpush.msra.mxu0 %v1207
        %1228 = vmatmul.f32.gmra.mxu0 %v1210
        %v1229 = vpop.f32.mrf.mxu0
        %v1230 = vadd.f32 0.0, %v1229
        %1231 = vdwg.mxu0
        %1232 = vrot.lane.b32.xlu0 %v971, 32
        %v1233 = vpop.permute.xlu0 %1232
        %v1236 = vsel %vm460, %v1136, 0
        %1238 = vmatpush.msra.mxu0 0.0
        %1239 = vmatpush.msra.mxu0 0.0
        %1240 = vmatpush.msra.mxu0 0.0
        %1241 = vmatpush.msra.mxu0 0.0
        %1242 = vmatpush.msra.mxu0 0.0
        %1243 = vmatpush.msra.mxu0 0.0
        %1244 = vmatpush.msra.mxu0 0.0
        %1245 = vmatpush.msra.mxu0 0.0
        %1246 = vmatpush.msra.mxu0 0.0
        %1247 = vmatpush.msra.mxu0 0.0
        %1248 = vmatpush.msra.mxu0 0.0
        %1249 = vmatpush.msra.mxu0 0.0
        %1250 = vmatpush.msra.mxu0 0.0
        %1251 = vmatpush.msra.mxu0 0.0
        %1252 = vmatpush.msra.mxu0 0.0
        %1253 = vmatpush.msra.mxu0 %v1233
        %1254 = vmatmul.f32.gmra.mxu0 %v1236
        %v1255 = vpop.f32.mrf.mxu0
        %v1256 = vadd.f32 %v1230, %v1255
        %1257 = vdwg.mxu0
        %1258 = vrot.lane.b32.xlu0 %v999, 112
        %v1259 = vpop.permute.xlu0 %1258
        %1260 = vrot.lane.b32.xlu0 %v1039, 112
        %v1261 = vpop.permute.xlu0 %1260
        %v1262 = vsel %vm460, %v1259, 0
        %v1264 = vsel %vm460, %v1261, 0
        %1266 = vmatpush.xpose.msra.mxu0 0.0
        %1267 = vmatpush.xpose.msra.mxu0 0.0
        %1268 = vmatpush.xpose.msra.mxu0 0.0
        %1269 = vmatpush.xpose.msra.mxu0 0.0
        %1270 = vmatpush.xpose.msra.mxu0 0.0
        %1271 = vmatpush.xpose.msra.mxu0 0.0
        %1272 = vmatpush.xpose.msra.mxu0 0.0
        %1273 = vmatpush.xpose.msra.mxu0 0.0
        %1274 = vmatpush.xpose.msra.mxu0 0.0
        %1275 = vmatpush.xpose.msra.mxu0 0.0
        %1276 = vmatpush.xpose.msra.mxu0 0.0
        %1277 = vmatpush.xpose.msra.mxu0 0.0
        %1278 = vmatpush.xpose.msra.mxu0 0.0
        %1279 = vmatpush.xpose.msra.mxu0 0.0
        %1280 = vmatpush.xpose.msra.mxu0 0.0
        %1281 = vmatpush.xpose.msra.mxu0 %v1264
        %1282 = vmatmul.f32.gmra.mxu0 %v1262
        %v1283 = vpop.f32.mrf.mxu0
        %v1284 = vadd.f32 0.0, %v1283
        %1285 = vdwg.mxu0
        %v1286 = vmul.f32 %v1284, 0.35355338
        %v1287 = vsel %vm460, %v1286, -inf
        %1288 = vmax.xlane.f32.xlu0 %v1287
        %v1289 = vpop.xlane.xlu0 %1288
        %v1290 = vsub.f32 %v1286, %v1289
        %v1291 = vmul.f32 %v1290, 1.442695
        %v1292 = vpow.pop %v1291
        %v1293 = vsel %vm460, %v1292, 0.0
        %1294 = vadd.xlane.f32.xlu0 %v1293
        %v1295 = vpop.xlane.xlu0 %1294
        %v1296 = vrcp.pop %v1295
        %v1297 = vmul.f32 %v1292, %v1296
        %v1298 = vadd.f32 %v1178, %v1297
        %1299 = vrot.lane.b32.xlu0 %v1074, 112
        %v1300 = vpop.permute.xlu0 %1299
        %v1303 = vsel %vm460, %v1297, 0
        %1305 = vmatpush.msra.mxu0 0.0
        %1306 = vmatpush.msra.mxu0 0.0
        %1307 = vmatpush.msra.mxu0 0.0
        %1308 = vmatpush.msra.mxu0 0.0
        %1309 = vmatpush.msra.mxu0 0.0
        %1310 = vmatpush.msra.mxu0 0.0
        %1311 = vmatpush.msra.mxu0 0.0
        %1312 = vmatpush.msra.mxu0 0.0
        %1313 = vmatpush.msra.mxu0 0.0
        %1314 = vmatpush.msra.mxu0 0.0
        %1315 = vmatpush.msra.mxu0 0.0
        %1316 = vmatpush.msra.mxu0 0.0
        %1317 = vmatpush.msra.mxu0 0.0
        %1318 = vmatpush.msra.mxu0 0.0
        %1319 = vmatpush.msra.mxu0 0.0
        %1320 = vmatpush.msra.mxu0 %v1300
        %1321 = vmatmul.f32.gmra.mxu0 %v1303
        %v1322 = vpop.f32.mrf.mxu0
        %v1323 = vadd.f32 0.0, %v1322
        %1324 = vdwg.mxu0
        %1325 = vrot.lane.b32.xlu0 %v973, 32
        %v1326 = vpop.permute.xlu0 %1325
        %v1329 = vsel %vm460, %v1323, 0
        %1331 = vmatpush.msra.mxu0 0.0
        %1332 = vmatpush.msra.mxu0 0.0
        %1333 = vmatpush.msra.mxu0 0.0
        %1334 = vmatpush.msra.mxu0 0.0
        %1335 = vmatpush.msra.mxu0 0.0
        %1336 = vmatpush.msra.mxu0 0.0
        %1337 = vmatpush.msra.mxu0 0.0
        %1338 = vmatpush.msra.mxu0 0.0
        %1339 = vmatpush.msra.mxu0 0.0
        %1340 = vmatpush.msra.mxu0 0.0
        %1341 = vmatpush.msra.mxu0 0.0
        %1342 = vmatpush.msra.mxu0 0.0
        %1343 = vmatpush.msra.mxu0 0.0
        %1344 = vmatpush.msra.mxu0 0.0
        %1345 = vmatpush.msra.mxu0 0.0
        %1346 = vmatpush.msra.mxu0 %v1326
        %1347 = vmatmul.f32.gmra.mxu0 %v1329
        %v1348 = vpop.f32.mrf.mxu0
        %v1349 = vadd.f32 0.0, %v1348
        %1350 = vdwg.mxu0
        %v1351 = vadd.f32 %v1256, %v1349
        %1352 = vrot.lane.b32.xlu0 %v999, 104
        %v1353 = vpop.permute.xlu0 %1352
        %1354 = vrot.lane.b32.xlu0 %v1039, 104
        %v1355 = vpop.permute.xlu0 %1354
        %v1356 = vsel %vm460, %v1353, 0
        %v1358 = vsel %vm460, %v1355, 0
        %1360 = vmatpush.xpose.msra.mxu0 0.0
        %1361 = vmatpush.xpose.msra.mxu0 0.0
        %1362 = vmatpush.xpose.msra.mxu0 0.0
        %1363 = vmatpush.xpose.msra.mxu0 0.0
        %1364 = vmatpush.xpose.msra.mxu0 0.0
        %1365 = vmatpush.xpose.msra.mxu0 0.0
        %1366 = vmatpush.xpose.msra.mxu0 0.0
        %1367 = vmatpush.xpose.msra.mxu0 0.0
        %1368 = vmatpush.xpose.msra.mxu0 0.0
        %1369 = vmatpush.xpose.msra.mxu0 0.0
        %1370 = vmatpush.xpose.msra.mxu0 0.0
        %1371 = vmatpush.xpose.msra.mxu0 0.0
        %1372 = vmatpush.xpose.msra.mxu0 0.0
        %1373 = vmatpush.xpose.msra.mxu0 0.0
        %1374 = vmatpush.xpose.msra.mxu0 0.0
        %1375 = vmatpush.xpose.msra.mxu0 %v1358
        %1376 = vmatmul.f32.gmra.mxu0 %v1356
        %v1377 = vpop.f32.mrf.mxu0
        %v1378 = vadd.f32 0.0, %v1377
        %1379 = vdwg.mxu0
        %v1380 = vmul.f32 %v1378, 0.35355338
        %v1381 = vsel %vm460, %v1380, -inf
        %1382 = vmax.xlane.f32.xlu0 %v1381
        %v1383 = vpop.xlane.xlu0 %1382
        %v1384 = vsub.f32 %v1380, %v1383
        %v1385 = vmul.f32 %v1384, 1.442695
        %v1386 = vpow.pop %v1385
        %v1387 = vsel %vm460, %v1386, 0.0
        %1388 = vadd.xlane.f32.xlu0 %v1387
        %v1389 = vpop.xlane.xlu0 %1388
        %v1390 = vrcp.pop %v1389
        %v1391 = vmul.f32 %v1386, %v1390
        %v1392 = vadd.f32 %v1298, %v1391
        %1393 = vrot.lane.b32.xlu0 %v1074, 104
        %v1394 = vpop.permute.xlu0 %1393
        %v1397 = vsel %vm460, %v1391, 0
        %1399 = vmatpush.msra.mxu0 0.0
        %1400 = vmatpush.msra.mxu0 0.0
        %1401 = vmatpush.msra.mxu0 0.0
        %1402 = vmatpush.msra.mxu0 0.0
        %1403 = vmatpush.msra.mxu0 0.0
        %1404 = vmatpush.msra.mxu0 0.0
        %1405 = vmatpush.msra.mxu0 0.0
        %1406 = vmatpush.msra.mxu0 0.0
        %1407 = vmatpush.msra.mxu0 0.0
        %1408 = vmatpush.msra.mxu0 0.0
        %1409 = vmatpush.msra.mxu0 0.0
        %1410 = vmatpush.msra.mxu0 0.0
        %1411 = vmatpush.msra.mxu0 0.0
        %1412 = vmatpush.msra.mxu0 0.0
        %1413 = vmatpush.msra.mxu0 0.0
        %1414 = vmatpush.msra.mxu0 %v1394
        %1415 = vmatmul.f32.gmra.mxu0 %v1397
        %v1416 = vpop.f32.mrf.mxu0
        %v1417 = vadd.f32 0.0, %v1416
        %1418 = vdwg.mxu0
        %1419 = vrot.lane.b32.xlu0 %v974, 32
        %v1420 = vpop.permute.xlu0 %1419
        %v1423 = vsel %vm460, %v1417, 0
        %1425 = vmatpush.msra.mxu0 0.0
        %1426 = vmatpush.msra.mxu0 0.0
        %1427 = vmatpush.msra.mxu0 0.0
        %1428 = vmatpush.msra.mxu0 0.0
        %1429 = vmatpush.msra.mxu0 0.0
        %1430 = vmatpush.msra.mxu0 0.0
        %1431 = vmatpush.msra.mxu0 0.0
        %1432 = vmatpush.msra.mxu0 0.0
        %1433 = vmatpush.msra.mxu0 0.0
        %1434 = vmatpush.msra.mxu0 0.0
        %1435 = vmatpush.msra.mxu0 0.0
        %1436 = vmatpush.msra.mxu0 0.0
        %1437 = vmatpush.msra.mxu0 0.0
        %1438 = vmatpush.msra.mxu0 0.0
        %1439 = vmatpush.msra.mxu0 0.0
        %1440 = vmatpush.msra.mxu0 %v1420
        %1441 = vmatmul.f32.gmra.mxu0 %v1423
        %v1442 = vpop.f32.mrf.mxu0
        %v1443 = vadd.f32 0.0, %v1442
        %1444 = vdwg.mxu0
        %v1445 = vadd.f32 %v1351, %v1443
        %1446 = vrot.lane.b32.xlu0 %v977, 32
        %v1447 = vpop.permute.xlu0 %1446
        %v1449 = vadd.f32 %v1445, %v1447
        %v1450 = vmul.f32 %v1392, 0.25
        %s1451 = scalar_lea.vmem %s333, 8 [#allocation4]
        %1452 = vst.msk [vmem:[%s1451] sm:$0xff] %vm460, %v1450
        %v1453 = vadd.f32 %v969, %v1449
        %v1454 = vsel %vm355, %v1453, 0.0
        %1455 = vadd.xlane.f32.xlu0 %v1454
        %v1456 = vpop.xlane.xlu0 %1455
        %v1457 = vmul.f32 %v1456, %v847
        %v1458 = vsub.f32 %v1453, %v1457
        %v1459 = vmul.f32 %v1458, %v1458
        %v1460 = vsel %vm355, %v1459, 0.0
        %1461 = vadd.xlane.f32.xlu0 %v1460
        %v1462 = vpop.xlane.xlu0 %1461
        %v1463 = vmul.f32 %v1462, %v847
        %v1464 = vadd.f32 %v1463, 1e-05
        %v1465 = vrsqrt.pop %v1464
        %v1466 = vmul.f32 %v1465, %v1464
        %v1467 = vmul.f32 %v1466, %v1465
        %v1468 = vmul.f32 0.5, %v1467
        %v1469 = vsub.f32 1.5, %v1468
        %v1470 = vmul.f32 %v1465, %v1469
        %vm1471 = vweird.f32 %v1464
        %vm1472 = vweird.f32 %v1465
        %vm1473 = vmor %vm1471, %vm1472
        %v1474 = vsel %vm1473, %v1465, %v1470
        %v1475 = vmul.f32 %v1458, %v1474
        %v1476 = vperm.slane %v976, 1
        %v1477 = vmul.f32 %v1475, %v1476
        %1479 = vrot.lane.b32.xlu0 %v1476, 96
        %v1480 = vpop.permute.xlu0 %1479
        %v1482 = vadd.f32 %v1477, %v1480
        %s1483 = scalar_lea.vmem %s5, 32
        %v1484 = vld [vmem:[%s1483] sm:$0xff]
        %v1485 = vld [vmem:[%s1483 + $0x8] sm:$0xff]
        %v1486 = vld [vmem:[%s1483 + $0x10] sm:$0xff]
        %v1487 = vld [vmem:[%s1483 + $0x18] sm:$0xff]
        %v1488 = vperm.slane %v976, 2
        %v1490 = vsel %vm355, %v1482, 0
        %1492 = vmatpush.msra.mxu0 0.0
        %1493 = vmatpush.msra.mxu0 0.0
        %1494 = vmatpush.msra.mxu0 0.0
        %1495 = vmatpush.msra.mxu0 0.0
        %1496 = vmatpush.msra.mxu0 0.0
        %1497 = vmatpush.msra.mxu0 0.0
        %1498 = vmatpush.msra.mxu0 0.0
        %1499 = vmatpush.msra.mxu0 0.0
        %1500 = vmatpush.msra.mxu0 0.0
        %1501 = vmatpush.msra.mxu0 0.0
        %1502 = vmatpush.msra.mxu0 0.0
        %1503 = vmatpush.msra.mxu0 0.0
        %1504 = vmatpush.msra.mxu0 %v1487
        %1505 = vmatpush.msra.mxu0 %v1486
        %1506 = vmatpush.msra.mxu0 %v1485
        %1507 = vmatpush.msra.mxu0 %v1484
        %1508 = vmatmul.f32.gmra.mxu0 %v1490
        %v1509 = vpop.f32.mrf.mxu0
        %v1510 = vadd.f32 %v1488, %v1509
        %1511 = vdwg.mxu0
        %v1512 = vmax.f32 %v1510, 0.0
        %s1513 = scalar_lea.vmem %s6, 64
        %v1514 = vld [vmem:[%s1513] sm:$0xff]
        %v1515 = vld [vmem:[%s1513 + $0x8] sm:$0xff]
        %v1516 = vld [vmem:[%s1513 + $0x10] sm:$0xff]
        %v1517 = vld [vmem:[%s1513 + $0x18] sm:$0xff]
        %v1518 = vld [vmem:[%s1513 + $0x20] sm:$0xff]
        %v1519 = vld [vmem:[%s1513 + $0x28] sm:$0xff]
        %v1520 = vld [vmem:[%s1513 + $0x30] sm:$0xff]
        %v1521 = vld [vmem:[%s1513 + $0x38] sm:$0xff]
        %1523 = vrot.lane.b32.xlu0 %v1488, 64
        %v1524 = vpop.permute.xlu0 %1523
        %v1527 = vsel %vm915, %v1512, 0
        %1529 = vmatpush.msra.mxu0 0.0
        %1530 = vmatpush.msra.mxu0 0.0
        %1531 = vmatpush.msra.mxu0 0.0
        %1532 = vmatpush.msra.mxu0 0.0
        %1533 = vmatpush.msra.mxu0 0.0
        %1534 = vmatpush.msra.mxu0 0.0
        %1535 = vmatpush.msra.mxu0 0.0
        %1536 = vmatpush.msra.mxu0 0.0
        %1537 = vmatpush.msra.mxu0 %v1521
        %1538 = vmatpush.msra.mxu0 %v1520
        %1539 = vmatpush.msra.mxu0 %v1519
        %1540 = vmatpush.msra.mxu0 %v1518
        %1541 = vmatpush.msra.mxu0 %v1517
        %1542 = vmatpush.msra.mxu0 %v1516
        %1543 = vmatpush.msra.mxu0 %v1515
        %1544 = vmatpush.msra.mxu0 %v1514
        %1545 = vmatmul.f32.gmra.mxu0 %v1527
        %v1546 = vpop.f32.mrf.mxu0
        %v1547 = vadd.f32 %v1524, %v1546
        %1548 = vdwg.mxu0
        %v1549 = vadd.f32 %v1482, %v1547
        %v1550 = vsel %vm355, %v1549, 0.0
        %1551 = vadd.xlane.f32.xlu0 %v1550
        %v1552 = vpop.xlane.xlu0 %1551
        %v1553 = vmul.f32 %v1552, %v847
        %v1554 = vsub.f32 %v1549, %v1553
        %v1555 = vmul.f32 %v1554, %v1554
        %v1556 = vsel %vm355, %v1555, 0.0
        %1557 = vadd.xlane.f32.xlu0 %v1556
        %v1558 = vpop.xlane.xlu0 %1557
        %v1559 = vmul.f32 %v1558, %v847
        %v1560 = vadd.f32 %v1559, 1e-05
        %v1561 = vrsqrt.pop %v1560
        %v1562 = vmul.f32 %v1561, %v1560
        %v1563 = vmul.f32 %v1562, %v1561
        %v1564 = vmul.f32 0.5, %v1563
        %v1565 = vsub.f32 1.5, %v1564
        %v1566 = vmul.f32 %v1561, %v1565
        %vm1567 = vweird.f32 %v1560
        %vm1568 = vweird.f32 %v1561
        %vm1569 = vmor %vm1567, %vm1568
        %v1570 = vsel %vm1569, %v1561, %v1566
        %v1571 = vmul.f32 %v1554, %v1570
        %1572 = vrot.lane.b32.xlu0 %v1476, 64
        %v1573 = vpop.permute.xlu0 %1572
        %v1575 = vmul.f32 %v1571, %v1573
        %1576 = vrot.lane.b32.xlu0 %v1476, 32
        %v1577 = vpop.permute.xlu0 %1576
        %v1579 = vadd.f32 %v1575, %v1577
        %1580 = vst.msk [vmem:[%s326] sm:$0xff] %vm355, %v1579
        %s1581 = sand.u32 %s196, 1
        %s1582 = scalar_lea.sflag [#allocation3], %s1581
        %s1583 = sand.u32 %s196, 1
        %s1584 = smul.addr %s1583, 8
        %s1585 = scalar_lea.vmem [#allocation2], %s1584
        %s1586 = sand.u32 %s222, 1
        %s1587 = scalar_lea.sflag [#allocation5], %s1586
        %s1588 = sand.u32 %s222, 1
        %s1589 = smul.addr %s1588, 16
        %s1590 = scalar_lea.vmem [#allocation4], %s1589
        // Predicated region
        $region49: #{tpu_custom_call.1} parent=47 // pred_check
          %p1591 = pneg %p206
        $region50: #{tpu_custom_call.1} parent=47 // pred_check_branch
          %1593 = sbr.rel (%p1591) target = $region52
        $region51: #{tpu_custom_call.1} parent=47 // pred_region
          %1595 = vsyncadd %s1582, 0
          %s1596 = smul.addr %s26, 8
          %s1597 = scalar_lea.hbm %s7, %s1596
          %s1599 = sshll.u32 %s1585, 4
          %s1600 = int_to_ptr.vmem [resolvable:$true] %s1599
          %s1601 = sshll.u32 %s1597, 4
          %s1602 = int_to_ptr.hbm [resolvable:$true] %s1601
          %1604 = dma.vmem_to_hbm [thread:$0]  %s1600, 128, %s1602, %s1582
        $region52: #{tpu_custom_call.1} parent=47 // pred_fallthru
          _
        // Predicated region
        $region53: #{tpu_custom_call.1} parent=47 // pred_check
          %p1605 = pneg %p232
        $region54: #{tpu_custom_call.1} parent=47 // pred_check_branch
          %1607 = sbr.rel (%p1605) target = $region56
        $region55: #{tpu_custom_call.1} parent=47 // pred_region
          %1609 = vsyncadd %s1587, 0
          %s1610 = smul.addr %s26, 8
          %s1611 = scalar_lea.hbm %s8, %s1610
          %s1612 = sshll.u32 %s1590, 4
          %s1613 = int_to_ptr.vmem [resolvable:$true] %s1612
          %s1614 = sshll.u32 %s1611, 4
          %s1615 = int_to_ptr.hbm [resolvable:$true] %s1614
          %1620 = dma.vmem_to_hbm [thread:$0]  %s1613, 256, %s1615, %s1587, 128, 256, 8
        $region56: #{tpu_custom_call.1} parent=47 // pred_fallthru
          _
      $region48: #{tpu_custom_call.1} parent=5 // pred_fallthru
        _
      %p1621 = scmp.le.s32.totalorder 2, %s21
      // Predicated region
      $region57: #{tpu_custom_call.1} parent=5 // pred_check
        %p1622 = pneg %p1621
      $region58: #{tpu_custom_call.1} parent=5 // pred_check_branch
        %1624 = sbr.rel (%p1622) target = $region60
      $region59: #{tpu_custom_call.1} parent=5 // pred_region
        %s1625 = ssub.s32 %s21, 2
        // Predicated region
        $region61: #{tpu_custom_call.1} parent=59 // pred_check
          %p1626 = pneg %p212
        $region62: #{tpu_custom_call.1} parent=59 // pred_check_branch
          %1628 = sbr.rel (%p1626) target = $region64
        $region63: #{tpu_custom_call.1} parent=59 // pred_region
          %s1629 = sand.u32 %s197, 1
          %s1630 = scalar_lea.sflag [#allocation3], %s1629
          %s1631 = sand.u32 %s197, 1
          %s1632 = smul.addr %s1631, 8
          %s1633 = scalar_lea.vmem [#allocation2], %s1632
          %1635 = dma.done %s1630, 128
        $region64: #{tpu_custom_call.1} parent=59 // pred_fallthru
          _
        // Predicated region
        $region65: #{tpu_custom_call.1} parent=59 // pred_check
          %p1636 = pneg %p238
        $region66: #{tpu_custom_call.1} parent=59 // pred_check_branch
          %1638 = sbr.rel (%p1636) target = $region68
        $region67: #{tpu_custom_call.1} parent=59 // pred_region
          %s1639 = sand.u32 %s223, 1
          %s1640 = scalar_lea.sflag [#allocation5], %s1639
          %s1641 = sand.u32 %s223, 1
          %s1642 = smul.addr %s1641, 16
          %s1643 = scalar_lea.vmem [#allocation4], %s1642
          %1645 = dma.done %s1640, 256
        $region68: #{tpu_custom_call.1} parent=59 // pred_fallthru
          _
      $region60: #{tpu_custom_call.1} parent=5 // pred_fallthru
        _
    $region6: #{tpu_custom_call.1} parent=1 // loop_footer
      %s25 = sadd.s32 1, %s21
    $region7: #{tpu_custom_call.1} parent=1 // loop_footer_branch
      %20 = sbr.rel target = $region3
    $region8: #{tpu_custom_call.1} parent=1 // loop_exit
      _
    %1646 = vsyncpa [#allocation3], 1
    %s1647 = scalar_lea.sflag [#allocation3], 1
    %1648 = vsyncpa %s1647, 1
    %1649 = vsyncpa [#allocation5], 1
    %s1650 = scalar_lea.sflag [#allocation5], 1
    %1651 = vsyncpa %s1650, 1

</llo_original>
